<compile_context>
chip_gen: v6e
topology: v6e:2x2x1
jax: 0.10.0
libtpu: 0.0.40
codegen_flags: <defaults>
</compile_context>

<pallas_src>
import functools
import math

import jax
import jax.numpy as jnp
import numpy as np
from jax.experimental import pallas as pl

# ----------------------------- config ---------------------------------------
CFG = dict(
    vocab_size=100,
    hidden_size=32,
    num_layers=2,
    num_heads=4,
    intermediate_size=64,
    max_position=16,
    type_vocab_size=2,
    num_category_labels=5,
    ln_eps=1e-12,
)

_LANES = 128        # lane width of the packed vector slab
_GLOBAL_ROWS = 4    # rows 0..3: emb_ln_g, emb_ln_b, pool_b, cls_b
_LAYER_ROWS = 8     # per-layer rows: bqkv, bo, ln1_g, ln1_b, bi, bf, ln2_g, ln2_b


# ----------------------------- fused Pallas kernel ---------------------------
def _bert_fused_kernel(
    emb_ref, vec_ref, const_ref, wmain_ref, wf_ref, out_ref,
    *, num_layers, num_heads, head_dim, seq_len, batch, intermediate,
    num_labels, eps,
):
    H = num_heads * head_dim
    H3 = 3 * H
    I = intermediate
    BS = batch * seq_len

    def vec(row, n):                       # one packed bias/LN row -> [1, n]
        return vec_ref[row:row + 1, 0:n]

    def layer_norm(h, g, b):
        # single-pass: two independent lane reductions (sum, sum of squares)
        mean = jnp.mean(h, axis=-1, keepdims=True)
        ex2 = jnp.mean(h * h, axis=-1, keepdims=True)
        var = ex2 - mean * mean
        return (h - mean) * jax.lax.rsqrt(var + eps) * g + b

    def gelu(y):
        # tanh-approx GELU (Mosaic-friendly).
        # TODO(synk): HF BERT default is erf-based gelu; tanh approximation used here.
        return 0.5 * y * (1.0 + jnp.tanh(0.7978845608028654 * (y + 0.044715 * y * y * y)))

    # ---- attention constants (loaded once, reused for all layers) ----
    # const_ref lanes [0, BS): static cross-batch additive mask (-1e9 off-block)
    # const_ref lanes [BS, BS+H): 0/1 head-block lane mask
    head_mask = const_ref[:, BS:BS + H]                                  # [nH*BS, H]
    mask_row = _GLOBAL_ROWS + num_layers * _LAYER_ROWS                   # runtime key-pad bias
    attn_bias = const_ref[:, 0:BS] + vec(mask_row, BS)                   # [nH*BS, BS]

    # ---- embeddings LayerNorm ----
    x = layer_norm(emb_ref[...], vec(0, H), vec(1, H))                   # [BS, H]

    # ---- encoder layers (static Python loop over stacked weights) ----
    for l in range(num_layers):
        base = _GLOBAL_ROWS + l * _LAYER_ROWS
        wqkv = wmain_ref[l, :, 0:H3]                                     # [H, 3H] (q pre-scaled)
        wo = wmain_ref[l, :, H3:H3 + H]                                  # [H, H]
        wi = wmain_ref[l, :, H3 + H:H3 + H + I]                          # [H, I]
        wf = wf_ref[l]                                                   # [I, H]

        qkv = jnp.dot(x, wqkv, preferred_element_type=jnp.float32) + vec(base + 0, H3)
        q = qkv[:, 0:H]
        k = qkv[:, H:2 * H]
        v = qkv[:, 2 * H:H3]

        # heads folded onto sublanes: row h*BS+i holds q[i] with only head h's lanes live
        q_bd = jnp.concatenate([q] * num_heads, axis=0) * head_mask      # [nH*BS, H]
        s = jax.lax.dot_general(q_bd, k, (((1,), (1,)), ((), ())),
                                preferred_element_type=jnp.float32) + attn_bias
        s = s - jnp.max(s, axis=-1, keepdims=True)
        p = jnp.exp(s)
        p = p * pl.reciprocal(jnp.sum(p, axis=-1, keepdims=True), approx=True)

        ctx_big = jnp.dot(p, v, preferred_element_type=jnp.float32) * head_mask  # [nH*BS, H]
        ctx = ctx_big[0:BS, :]                                           # fold head blocks back
        for h in range(1, num_heads):
            ctx = ctx + ctx_big[h * BS:(h + 1) * BS, :]                  # [BS, H]

        attn_out = jnp.dot(ctx, wo, preferred_element_type=jnp.float32) + vec(base + 1, H)
        x = layer_norm(x + attn_out, vec(base + 2, H), vec(base + 3, H))

        inter = gelu(jnp.dot(x, wi, preferred_element_type=jnp.float32) + vec(base + 4, I))
        ffn = jnp.dot(inter, wf, preferred_element_type=jnp.float32) + vec(base + 5, H)
        x = layer_norm(x + ffn, vec(base + 6, H), vec(base + 7, H))

    # ---- pooler + category classifier on the CLS rows (0, S, 2S, ...) ----
    cls_tok = jnp.concatenate(
        [x[b * seq_len:b * seq_len + 1, :] for b in range(batch)], axis=0)       # [B, H]
    pool_w = wmain_ref[num_layers, :, 0:H]
    cls_w = wmain_ref[num_layers, :, H:H + num_labels]
    pooled = jnp.tanh(jnp.dot(cls_tok, pool_w, preferred_element_type=jnp.float32) + vec(2, H))
    logits = jnp.dot(pooled, cls_w, preferred_element_type=jnp.float32) + vec(3, num_labels)
    out_ref[...] = logits


# ----------------------------- parameters -----------------------------------
def init_params(key):
    H = CFG["hidden_size"]
    I = CFG["intermediate_size"]
    keys = iter(jax.random.split(key, 8 + 8 * CFG["num_layers"]))

    def w(shape, scale=0.02):
        return (scale * jax.random.normal(next(keys), shape)).astype(jnp.float32)

    def zeros(n):
        return jnp.zeros((n,), jnp.float32)

    def ones(n):
        return jnp.ones((n,), jnp.float32)

    params = {
        "word_emb": w((CFG["vocab_size"], H)),
        "pos_emb": w((CFG["max_position"], H)),
        "type_emb": w((CFG["type_vocab_size"], H)),
        "emb_ln_g": ones(H),
        "emb_ln_b": zeros(H),
        "layers": [],
        "pool_w": w((H, H)),
        "pool_b": zeros(H),
        "cls_w": w((H, CFG["num_category_labels"])),
        "cls_b": zeros(CFG["num_category_labels"]),
    }
    for _ in range(CFG["num_layers"]):
        params["layers"].append({
            "wq": w((H, H)), "bq": zeros(H),
            "wk": w((H, H)), "bk": zeros(H),
            "wv": w((H, H)), "bv": zeros(H),
            "wo": w((H, H)), "bo": zeros(H),
            "ln1_g": ones(H), "ln1_b": zeros(H),
            "wi": w((H, I)), "bi": zeros(I),
            "wf": w((I, H)), "bf": zeros(H),
            "ln2_g": ones(H), "ln2_b": zeros(H),
        })
    return params


def pack_params(params):
    """Pack parameters into a few lane-dense slabs (one DMA each).

    - vec    [4+8L, 128] : all 1-D vectors, one padded row each (1/sqrt(dH) folded
                           into the q-part of bqkv).
    - w_main [L+1, H, 192]: per layer wqkv|wo|wi fused along lanes (q pre-scaled);
                           extra pseudo-layer holds pool_w|cls_w.
    - w_f    [L, I, H]   : FFN down-projection weights.
    """
    H = CFG["hidden_size"]
    I = CFG["intermediate_size"]
    C = CFG["num_category_labels"]
    dH = H // CFG["num_heads"]
    scale = 1.0 / math.sqrt(dH)
    W = 3 * H + H + I                      # fused per-layer weight lane width

    def row(v):
        v = jnp.asarray(v, jnp.float32).reshape(1, -1)
        return jnp.pad(v, ((0, 0), (0, _LANES - v.shape[1])))

    rows = [row(params["emb_ln_g"]), row(params["emb_ln_b"]),
            row(params["pool_b"]), row(params["cls_b"])]
    w_main, w_f = [], []
    for l in params["layers"]:
        wqkv = jnp.concatenate([l["wq"] * scale, l["wk"], l["wv"]], axis=1)   # [H, 3H]
        bqkv = jnp.concatenate([l["bq"] * scale, l["bk"], l["bv"]])           # [3H]
        w_main.append(jnp.concatenate([wqkv, l["wo"], l["wi"]], axis=1))      # [H, 192]
        w_f.append(l["wf"])
        rows += [row(bqkv), row(l["bo"]), row(l["ln1_g"]), row(l["ln1_b"]),
                 row(l["bi"]), row(l["bf"]), row(l["ln2_g"]), row(l["ln2_b"])]

    head = jnp.concatenate([params["pool_w"], params["cls_w"]], axis=1)       # [H, H+C]
    head = jnp.pad(head, ((0, 0), (0, W - (H + C))))
    w_main.append(head)

    return {
        "word_emb": params["word_emb"],
        "pos_emb": params["pos_emb"],
        "type_emb": params["type_emb"],
        "vec": jnp.concatenate(rows, axis=0),      # [4 + 8L, 128]
        "w_main": jnp.stack(w_main),               # [L+1, H, 192]
        "w_f": jnp.stack(w_f),                     # [L, I, H]
    }


# ----------------------------- forward --------------------------------------
def category_only_bert(packed, input_ids, attention_mask=None, token_type_ids=None):
    B, S = input_ids.shape
    H = CFG["hidden_size"]
    nH = CFG["num_heads"]
    dH = H // nH
    C = CFG["num_category_labels"]
    L = CFG["num_layers"]
    I = CFG["intermediate_size"]
    BS = B * S
    assert BS <= _LANES, "packed mask row assumes B*S <= 128"
    # TODO(synk): if B*S grows past a few hundred rows, add a parallel token grid
    # axis so v7x's second TensorCore is used; pointless at this size.

    if attention_mask is None:
        attention_mask = jnp.ones((B, S), jnp.int32)
    if token_type_ids is None:
        token_type_ids = jnp.zeros((B, S), jnp.int32)

    # --- embedding gathers are plain-JAX glue (data-dependent gather) ---
    pos_ids = jnp.arange(S, dtype=jnp.int32)[None, :]
    emb = (packed["word_emb"][input_ids]
           + packed["pos_emb"][pos_ids]
           + packed["type_emb"][token_type_ids]).reshape(BS, H).astype(jnp.float32)

    # --- runtime key-padding bias row appended to the parameter vector slab ---
    key_bias = (attention_mask.astype(jnp.float32).reshape(1, BS) - 1.0) * 10000.0
    mask_row = jnp.zeros((1, _LANES), jnp.float32).at[:, :BS].set(key_bias)
    vec_slab = jnp.concatenate([packed["vec"], mask_row], axis=0)

    # --- static attention constants, built with numpy at trace time ---
    tok = np.arange(nH * BS) % BS
    cross = np.where((tok // S)[:, None] == (np.arange(BS) // S)[None, :],
                     0.0, -1.0e9).astype(np.float32)                     # [nH*BS, BS]
    hmask = ((np.arange(nH * BS) // BS)[:, None]
             == (np.arange(H) // dH)[None, :]).astype(np.float32)        # [nH*BS, H]
    attn_const = jnp.asarray(np.concatenate([cross, hmask], axis=1))     # [nH*BS, BS+H]

    kernel = functools.partial(
        _bert_fused_kernel,
        num_layers=L, num_heads=nH, head_dim=dH, seq_len=S, batch=B,
        intermediate=I, num_labels=C, eps=CFG["ln_eps"],
    )

    # Single fused, gridless kernel: 5 whole-array VMEM-resident inputs, no grid
    # loop / revolving buffers (nothing to pipeline at this size).
    return pl.pallas_call(
        kernel,
        out_shape=jax.ShapeDtypeStruct((B, C), jnp.float32),
    )(emb, vec_slab, attn_const, packed["w_main"], packed["w_f"])


# ----------------------------- main ------------------------------------------
if __name__ == "__main__":
    key = jax.random.PRNGKey(0)
    pkey, dkey = jax.random.split(key)
    params = init_params(pkey)
    packed = pack_params(params)

    B, S = 2, 8
    input_ids = jax.random.randint(dkey, (B, S), 0, CFG["vocab_size"], dtype=jnp.int32)
    attention_mask = jnp.ones((B, S), jnp.int32)
    token_type_ids = jnp.zeros((B, S), jnp.int32)

    logits = category_only_bert(packed, input_ids, attention_mask, token_type_ids)
    jax.block_until_ready(logits)
    assert logits.shape == (B, CFG["num_category_labels"])
    print("KERNEL_OK")
</pallas_src>

<mosaic_0001>
module attributes {stable_mosaic.version = 11 : i64} {
  func.func @_bert_fused_kernel(%arg0: memref<16x32xf32, #tpu.memory_space<vmem>>, %arg1: memref<21x128xf32, #tpu.memory_space<vmem>>, %arg2: memref<64x48xf32, #tpu.memory_space<vmem>>, %arg3: memref<3x32x192xf32, #tpu.memory_space<vmem>>, %arg4: memref<2x64x32xf32, #tpu.memory_space<vmem>>, %arg5: memref<2x5xf32, #tpu.memory_space<vmem>>) attributes {dimension_semantics = [], scalar_prefetch = 0 : i64, scratch_operands = 0 : i64, tpu.core_type = #tpu.core_type<tc>} {
    %c0 = arith.constant 0 : index
    %c16 = arith.constant 16 : index
    %0 = vector.load %arg2[%c0, %c16] : memref<64x48xf32, #tpu.memory_space<vmem>>, vector<64x32xf32>
    %c0_0 = arith.constant 0 : index
    %c0_1 = arith.constant 0 : index
    %1 = vector.load %arg2[%c0_0, %c0_1] : memref<64x48xf32, #tpu.memory_space<vmem>>, vector<64x16xf32>
    %c20 = arith.constant 20 : index
    %c0_2 = arith.constant 0 : index
    %2 = vector.load %arg1[%c20, %c0_2] : memref<21x128xf32, #tpu.memory_space<vmem>>, vector<1x16xf32>
    %3 = vector.broadcast %2 : vector<1x16xf32> to vector<64x16xf32>
    %4 = arith.addf %1, %3 : vector<64x16xf32>
    %c0_3 = arith.constant 0 : index
    %c0_4 = arith.constant 0 : index
    %5 = vector.load %arg0[%c0_3, %c0_4] : memref<16x32xf32, #tpu.memory_space<vmem>>, vector<16x32xf32>
    %c0_5 = arith.constant 0 : index
    %c0_6 = arith.constant 0 : index
    %6 = vector.load %arg1[%c0_5, %c0_6] : memref<21x128xf32, #tpu.memory_space<vmem>>, vector<1x32xf32>
    %c1 = arith.constant 1 : index
    %c0_7 = arith.constant 0 : index
    %7 = vector.load %arg1[%c1, %c0_7] : memref<21x128xf32, #tpu.memory_space<vmem>>, vector<1x32xf32>
    %cst = arith.constant dense<0.000000e+00> : vector<16xf32>
    %8 = vector.multi_reduction <add>, %5, %cst [1] : vector<16x32xf32> to vector<16xf32>
    %9 = vector.shape_cast %8 : vector<16xf32> to vector<16x1xf32>
    %cst_8 = arith.constant 3.200000e+01 : f32
    %10 = vector.broadcast %cst_8 : f32 to vector<16x1xf32>
    %11 = arith.divf %9, %10 : vector<16x1xf32>
    %12 = arith.mulf %5, %5 : vector<16x32xf32>
    %cst_9 = arith.constant dense<0.000000e+00> : vector<16xf32>
    %13 = vector.multi_reduction <add>, %12, %cst_9 [1] : vector<16x32xf32> to vector<16xf32>
    %14 = vector.shape_cast %13 : vector<16xf32> to vector<16x1xf32>
    %cst_10 = arith.constant 3.200000e+01 : f32
    %15 = vector.broadcast %cst_10 : f32 to vector<16x1xf32>
    %16 = arith.divf %14, %15 : vector<16x1xf32>
    %17 = arith.mulf %11, %11 : vector<16x1xf32>
    %18 = arith.subf %16, %17 : vector<16x1xf32>
    %19 = vector.broadcast %11 : vector<16x1xf32> to vector<16x32xf32>
    %20 = arith.subf %5, %19 : vector<16x32xf32>
    %cst_11 = arith.constant 9.99999996E-13 : f32
    %21 = vector.broadcast %cst_11 : f32 to vector<16x1xf32>
    %22 = arith.addf %18, %21 : vector<16x1xf32>
    %23 = math.rsqrt %22 : vector<16x1xf32>
    %24 = vector.broadcast %23 : vector<16x1xf32> to vector<16x32xf32>
    %25 = arith.mulf %20, %24 : vector<16x32xf32>
    %26 = vector.broadcast %6 : vector<1x32xf32> to vector<16x32xf32>
    %27 = arith.mulf %25, %26 : vector<16x32xf32>
    %28 = vector.broadcast %7 : vector<1x32xf32> to vector<16x32xf32>
    %29 = arith.addf %27, %28 : vector<16x32xf32>
    %c0_12 = arith.constant 0 : index
    %c0_13 = arith.constant 0 : index
    %c0_14 = arith.constant 0 : index
    %30 = vector.load %arg3[%c0_12, %c0_13, %c0_14] : memref<3x32x192xf32, #tpu.memory_space<vmem>>, vector<1x32x96xf32>
    %31 = vector.shape_cast %30 : vector<1x32x96xf32> to vector<32x96xf32>
    %c0_15 = arith.constant 0 : index
    %c0_16 = arith.constant 0 : index
    %c96 = arith.constant 96 : index
    %32 = vector.load %arg3[%c0_15, %c0_16, %c96] : memref<3x32x192xf32, #tpu.memory_space<vmem>>, vector<1x32x32xf32>
    %33 = vector.shape_cast %32 : vector<1x32x32xf32> to vector<32x32xf32>
    %c0_17 = arith.constant 0 : index
    %c0_18 = arith.constant 0 : index
    %c128 = arith.constant 128 : index
    %34 = vector.load %arg3[%c0_17, %c0_18, %c128] : memref<3x32x192xf32, #tpu.memory_space<vmem>>, vector<1x32x64xf32>
    %35 = vector.shape_cast %34 : vector<1x32x64xf32> to vector<32x64xf32>
    %c0_19 = arith.constant 0 : index
    %c0_20 = arith.constant 0 : index
    %c0_21 = arith.constant 0 : index
    %36 = vector.load %arg4[%c0_19, %c0_20, %c0_21] : memref<2x64x32xf32, #tpu.memory_space<vmem>>, vector<1x64x32xf32>
    %37 = vector.shape_cast %36 : vector<1x64x32xf32> to vector<64x32xf32>
    %cst_22 = arith.constant dense<0.000000e+00> : vector<16x96xf32>
    %38 = tpu.matmul %29, %31, %cst_22 {dimension_numbers = #tpu.dot_dimension_numbers<[1], [0], [0], [1], [0, 0, 1, 1], [], []>} : vector<16x32xf32>, vector<32x96xf32>, vector<16x96xf32> -> vector<16x96xf32>
    %c4 = arith.constant 4 : index
    %c0_23 = arith.constant 0 : index
    %39 = vector.load %arg1[%c4, %c0_23] : memref<21x128xf32, #tpu.memory_space<vmem>>, vector<1x96xf32>
    %40 = vector.broadcast %39 : vector<1x96xf32> to vector<16x96xf32>
    %41 = arith.addf %38, %40 : vector<16x96xf32>
    %42 = vector.extract_strided_slice %41 {offsets = [0, 0], sizes = [16, 32], strides = [1, 1]} : vector<16x96xf32> to vector<16x32xf32>
    %43 = vector.extract_strided_slice %41 {offsets = [0, 32], sizes = [16, 32], strides = [1, 1]} : vector<16x96xf32> to vector<16x32xf32>
    %44 = vector.extract_strided_slice %41 {offsets = [0, 64], sizes = [16, 32], strides = [1, 1]} : vector<16x96xf32> to vector<16x32xf32>
    %45 = tpu.concatenate %42, %42, %42, %42 in 0 : vector<16x32xf32>, vector<16x32xf32>, vector<16x32xf32>, vector<16x32xf32> -> vector<64x32xf32>
    %46 = arith.mulf %45, %0 : vector<64x32xf32>
    %cst_24 = arith.constant dense<0.000000e+00> : vector<64x16xf32>
    %47 = tpu.matmul %46, %43, %cst_24 {dimension_numbers = #tpu.dot_dimension_numbers<[1], [1], [0], [0], [0, 0, 1, 0], [], []>} : vector<64x32xf32>, vector<16x32xf32>, vector<64x16xf32> -> vector<64x16xf32>
    %48 = arith.addf %47, %4 : vector<64x16xf32>
    %cst_25 = arith.constant dense<0xFF800000> : vector<64xf32>
    %49 = vector.multi_reduction <maximumf>, %48, %cst_25 [1] : vector<64x16xf32> to vector<64xf32>
    %50 = vector.shape_cast %49 : vector<64xf32> to vector<64x1xf32>
    %51 = vector.broadcast %50 : vector<64x1xf32> to vector<64x16xf32>
    %52 = arith.subf %48, %51 : vector<64x16xf32>
    %53 = math.exp %52 : vector<64x16xf32>
    %cst_26 = arith.constant dense<0.000000e+00> : vector<64xf32>
    %54 = vector.multi_reduction <add>, %53, %cst_26 [1] : vector<64x16xf32> to vector<64xf32>
    %55 = vector.shape_cast %54 : vector<64xf32> to vector<64x1xf32>
    %56 = tpu.reciprocal %55 {approx = true} : vector<64x1xf32> -> vector<64x1xf32>
    %57 = vector.broadcast %56 : vector<64x1xf32> to vector<64x16xf32>
    %58 = arith.mulf %53, %57 : vector<64x16xf32>
    %cst_27 = arith.constant dense<0.000000e+00> : vector<64x32xf32>
    %59 = tpu.matmul %58, %44, %cst_27 {dimension_numbers = #tpu.dot_dimension_numbers<[1], [0], [0], [1], [0, 0, 1, 1], [], []>} : vector<64x16xf32>, vector<16x32xf32>, vector<64x32xf32> -> vector<64x32xf32>
    %60 = arith.mulf %59, %0 : vector<64x32xf32>
    %61 = vector.extract_strided_slice %60 {offsets = [0, 0], sizes = [16, 32], strides = [1, 1]} : vector<64x32xf32> to vector<16x32xf32>
    %62 = vector.extract_strided_slice %60 {offsets = [16, 0], sizes = [16, 32], strides = [1, 1]} : vector<64x32xf32> to vector<16x32xf32>
    %63 = arith.addf %61, %62 : vector<16x32xf32>
    %64 = vector.extract_strided_slice %60 {offsets = [32, 0], sizes = [16, 32], strides = [1, 1]} : vector<64x32xf32> to vector<16x32xf32>
    %65 = arith.addf %63, %64 : vector<16x32xf32>
    %66 = vector.extract_strided_slice %60 {offsets = [48, 0], sizes = [16, 32], strides = [1, 1]} : vector<64x32xf32> to vector<16x32xf32>
    %67 = arith.addf %65, %66 : vector<16x32xf32>
    %cst_28 = arith.constant dense<0.000000e+00> : vector<16x32xf32>
    %68 = tpu.matmul %67, %33, %cst_28 {dimension_numbers = #tpu.dot_dimension_numbers<[1], [0], [0], [1], [0, 0, 1, 1], [], []>} : vector<16x32xf32>, vector<32x32xf32>, vector<16x32xf32> -> vector<16x32xf32>
    %c5 = arith.constant 5 : index
    %c0_29 = arith.constant 0 : index
    %69 = vector.load %arg1[%c5, %c0_29] : memref<21x128xf32, #tpu.memory_space<vmem>>, vector<1x32xf32>
    %70 = vector.broadcast %69 : vector<1x32xf32> to vector<16x32xf32>
    %71 = arith.addf %68, %70 : vector<16x32xf32>
    %72 = arith.addf %29, %71 : vector<16x32xf32>
    %c6 = arith.constant 6 : index
    %c0_30 = arith.constant 0 : index
    %73 = vector.load %arg1[%c6, %c0_30] : memref<21x128xf32, #tpu.memory_space<vmem>>, vector<1x32xf32>
    %c7 = arith.constant 7 : index
    %c0_31 = arith.constant 0 : index
    %74 = vector.load %arg1[%c7, %c0_31] : memref<21x128xf32, #tpu.memory_space<vmem>>, vector<1x32xf32>
    %cst_32 = arith.constant dense<0.000000e+00> : vector<16xf32>
    %75 = vector.multi_reduction <add>, %72, %cst_32 [1] : vector<16x32xf32> to vector<16xf32>
    %76 = vector.shape_cast %75 : vector<16xf32> to vector<16x1xf32>
    %cst_33 = arith.constant 3.200000e+01 : f32
    %77 = vector.broadcast %cst_33 : f32 to vector<16x1xf32>
    %78 = arith.divf %76, %77 : vector<16x1xf32>
    %79 = arith.mulf %72, %72 : vector<16x32xf32>
    %cst_34 = arith.constant dense<0.000000e+00> : vector<16xf32>
    %80 = vector.multi_reduction <add>, %79, %cst_34 [1] : vector<16x32xf32> to vector<16xf32>
    %81 = vector.shape_cast %80 : vector<16xf32> to vector<16x1xf32>
    %cst_35 = arith.constant 3.200000e+01 : f32
    %82 = vector.broadcast %cst_35 : f32 to vector<16x1xf32>
    %83 = arith.divf %81, %82 : vector<16x1xf32>
    %84 = arith.mulf %78, %78 : vector<16x1xf32>
    %85 = arith.subf %83, %84 : vector<16x1xf32>
    %86 = vector.broadcast %78 : vector<16x1xf32> to vector<16x32xf32>
    %87 = arith.subf %72, %86 : vector<16x32xf32>
    %cst_36 = arith.constant 9.99999996E-13 : f32
    %88 = vector.broadcast %cst_36 : f32 to vector<16x1xf32>
    %89 = arith.addf %85, %88 : vector<16x1xf32>
    %90 = math.rsqrt %89 : vector<16x1xf32>
    %91 = vector.broadcast %90 : vector<16x1xf32> to vector<16x32xf32>
    %92 = arith.mulf %87, %91 : vector<16x32xf32>
    %93 = vector.broadcast %73 : vector<1x32xf32> to vector<16x32xf32>
    %94 = arith.mulf %92, %93 : vector<16x32xf32>
    %95 = vector.broadcast %74 : vector<1x32xf32> to vector<16x32xf32>
    %96 = arith.addf %94, %95 : vector<16x32xf32>
    %cst_37 = arith.constant dense<0.000000e+00> : vector<16x64xf32>
    %97 = tpu.matmul %96, %35, %cst_37 {dimension_numbers = #tpu.dot_dimension_numbers<[1], [0], [0], [1], [0, 0, 1, 1], [], []>} : vector<16x32xf32>, vector<32x64xf32>, vector<16x64xf32> -> vector<16x64xf32>
    %c8 = arith.constant 8 : index
    %c0_38 = arith.constant 0 : index
    %98 = vector.load %arg1[%c8, %c0_38] : memref<21x128xf32, #tpu.memory_space<vmem>>, vector<1x64xf32>
    %99 = vector.broadcast %98 : vector<1x64xf32> to vector<16x64xf32>
    %100 = arith.addf %97, %99 : vector<16x64xf32>
    %cst_39 = arith.constant 5.000000e-01 : f32
    %101 = vector.broadcast %cst_39 : f32 to vector<16x64xf32>
    %102 = arith.mulf %101, %100 : vector<16x64xf32>
    %cst_40 = arith.constant 4.471500e-02 : f32
    %103 = vector.broadcast %cst_40 : f32 to vector<16x64xf32>
    %104 = arith.mulf %103, %100 : vector<16x64xf32>
    %105 = arith.mulf %104, %100 : vector<16x64xf32>
    %106 = arith.mulf %105, %100 : vector<16x64xf32>
    %107 = arith.addf %100, %106 : vector<16x64xf32>
    %cst_41 = arith.constant 0.797884583 : f32
    %108 = vector.broadcast %cst_41 : f32 to vector<16x64xf32>
    %109 = arith.mulf %108, %107 : vector<16x64xf32>
    %110 = math.tanh %109 : vector<16x64xf32>
    %cst_42 = arith.constant 1.000000e+00 : f32
    %111 = vector.broadcast %cst_42 : f32 to vector<16x64xf32>
    %112 = arith.addf %111, %110 : vector<16x64xf32>
    %113 = arith.mulf %102, %112 : vector<16x64xf32>
    %cst_43 = arith.constant dense<0.000000e+00> : vector<16x32xf32>
    %114 = tpu.matmul %113, %37, %cst_43 {dimension_numbers = #tpu.dot_dimension_numbers<[1], [0], [0], [1], [0, 0, 1, 1], [], []>} : vector<16x64xf32>, vector<64x32xf32>, vector<16x32xf32> -> vector<16x32xf32>
    %c9 = arith.constant 9 : index
    %c0_44 = arith.constant 0 : index
    %115 = vector.load %arg1[%c9, %c0_44] : memref<21x128xf32, #tpu.memory_space<vmem>>, vector<1x32xf32>
    %116 = vector.broadcast %115 : vector<1x32xf32> to vector<16x32xf32>
    %117 = arith.addf %114, %116 : vector<16x32xf32>
    %118 = arith.addf %96, %117 : vector<16x32xf32>
    %c10 = arith.constant 10 : index
    %c0_45 = arith.constant 0 : index
    %119 = vector.load %arg1[%c10, %c0_45] : memref<21x128xf32, #tpu.memory_space<vmem>>, vector<1x32xf32>
    %c11 = arith.constant 11 : index
    %c0_46 = arith.constant 0 : index
    %120 = vector.load %arg1[%c11, %c0_46] : memref<21x128xf32, #tpu.memory_space<vmem>>, vector<1x32xf32>
    %cst_47 = arith.constant dense<0.000000e+00> : vector<16xf32>
    %121 = vector.multi_reduction <add>, %118, %cst_47 [1] : vector<16x32xf32> to vector<16xf32>
    %122 = vector.shape_cast %121 : vector<16xf32> to vector<16x1xf32>
    %cst_48 = arith.constant 3.200000e+01 : f32
    %123 = vector.broadcast %cst_48 : f32 to vector<16x1xf32>
    %124 = arith.divf %122, %123 : vector<16x1xf32>
    %125 = arith.mulf %118, %118 : vector<16x32xf32>
    %cst_49 = arith.constant dense<0.000000e+00> : vector<16xf32>
    %126 = vector.multi_reduction <add>, %125, %cst_49 [1] : vector<16x32xf32> to vector<16xf32>
    %127 = vector.shape_cast %126 : vector<16xf32> to vector<16x1xf32>
    %cst_50 = arith.constant 3.200000e+01 : f32
    %128 = vector.broadcast %cst_50 : f32 to vector<16x1xf32>
    %129 = arith.divf %127, %128 : vector<16x1xf32>
    %130 = arith.mulf %124, %124 : vector<16x1xf32>
    %131 = arith.subf %129, %130 : vector<16x1xf32>
    %132 = vector.broadcast %124 : vector<16x1xf32> to vector<16x32xf32>
    %133 = arith.subf %118, %132 : vector<16x32xf32>
    %cst_51 = arith.constant 9.99999996E-13 : f32
    %134 = vector.broadcast %cst_51 : f32 to vector<16x1xf32>
    %135 = arith.addf %131, %134 : vector<16x1xf32>
    %136 = math.rsqrt %135 : vector<16x1xf32>
    %137 = vector.broadcast %136 : vector<16x1xf32> to vector<16x32xf32>
    %138 = arith.mulf %133, %137 : vector<16x32xf32>
    %139 = vector.broadcast %119 : vector<1x32xf32> to vector<16x32xf32>
    %140 = arith.mulf %138, %139 : vector<16x32xf32>
    %141 = vector.broadcast %120 : vector<1x32xf32> to vector<16x32xf32>
    %142 = arith.addf %140, %141 : vector<16x32xf32>
    %c1_52 = arith.constant 1 : index
    %c0_53 = arith.constant 0 : index
    %c0_54 = arith.constant 0 : index
    %143 = vector.load %arg3[%c1_52, %c0_53, %c0_54] : memref<3x32x192xf32, #tpu.memory_space<vmem>>, vector<1x32x96xf32>
    %144 = vector.shape_cast %143 : vector<1x32x96xf32> to vector<32x96xf32>
    %c1_55 = arith.constant 1 : index
    %c0_56 = arith.constant 0 : index
    %c96_57 = arith.constant 96 : index
    %145 = vector.load %arg3[%c1_55, %c0_56, %c96_57] : memref<3x32x192xf32, #tpu.memory_space<vmem>>, vector<1x32x32xf32>
    %146 = vector.shape_cast %145 : vector<1x32x32xf32> to vector<32x32xf32>
    %c1_58 = arith.constant 1 : index
    %c0_59 = arith.constant 0 : index
    %c128_60 = arith.constant 128 : index
    %147 = vector.load %arg3[%c1_58, %c0_59, %c128_60] : memref<3x32x192xf32, #tpu.memory_space<vmem>>, vector<1x32x64xf32>
    %148 = vector.shape_cast %147 : vector<1x32x64xf32> to vector<32x64xf32>
    %c1_61 = arith.constant 1 : index
    %c0_62 = arith.constant 0 : index
    %c0_63 = arith.constant 0 : index
    %149 = vector.load %arg4[%c1_61, %c0_62, %c0_63] : memref<2x64x32xf32, #tpu.memory_space<vmem>>, vector<1x64x32xf32>
    %150 = vector.shape_cast %149 : vector<1x64x32xf32> to vector<64x32xf32>
    %cst_64 = arith.constant dense<0.000000e+00> : vector<16x96xf32>
    %151 = tpu.matmul %142, %144, %cst_64 {dimension_numbers = #tpu.dot_dimension_numbers<[1], [0], [0], [1], [0, 0, 1, 1], [], []>} : vector<16x32xf32>, vector<32x96xf32>, vector<16x96xf32> -> vector<16x96xf32>
    %c12 = arith.constant 12 : index
    %c0_65 = arith.constant 0 : index
    %152 = vector.load %arg1[%c12, %c0_65] : memref<21x128xf32, #tpu.memory_space<vmem>>, vector<1x96xf32>
    %153 = vector.broadcast %152 : vector<1x96xf32> to vector<16x96xf32>
    %154 = arith.addf %151, %153 : vector<16x96xf32>
    %155 = vector.extract_strided_slice %154 {offsets = [0, 0], sizes = [16, 32], strides = [1, 1]} : vector<16x96xf32> to vector<16x32xf32>
    %156 = vector.extract_strided_slice %154 {offsets = [0, 32], sizes = [16, 32], strides = [1, 1]} : vector<16x96xf32> to vector<16x32xf32>
    %157 = vector.extract_strided_slice %154 {offsets = [0, 64], sizes = [16, 32], strides = [1, 1]} : vector<16x96xf32> to vector<16x32xf32>
    %158 = tpu.concatenate %155, %155, %155, %155 in 0 : vector<16x32xf32>, vector<16x32xf32>, vector<16x32xf32>, vector<16x32xf32> -> vector<64x32xf32>
    %159 = arith.mulf %158, %0 : vector<64x32xf32>
    %cst_66 = arith.constant dense<0.000000e+00> : vector<64x16xf32>
    %160 = tpu.matmul %159, %156, %cst_66 {dimension_numbers = #tpu.dot_dimension_numbers<[1], [1], [0], [0], [0, 0, 1, 0], [], []>} : vector<64x32xf32>, vector<16x32xf32>, vector<64x16xf32> -> vector<64x16xf32>
    %161 = arith.addf %160, %4 : vector<64x16xf32>
    %cst_67 = arith.constant dense<0xFF800000> : vector<64xf32>
    %162 = vector.multi_reduction <maximumf>, %161, %cst_67 [1] : vector<64x16xf32> to vector<64xf32>
    %163 = vector.shape_cast %162 : vector<64xf32> to vector<64x1xf32>
    %164 = vector.broadcast %163 : vector<64x1xf32> to vector<64x16xf32>
    %165 = arith.subf %161, %164 : vector<64x16xf32>
    %166 = math.exp %165 : vector<64x16xf32>
    %cst_68 = arith.constant dense<0.000000e+00> : vector<64xf32>
    %167 = vector.multi_reduction <add>, %166, %cst_68 [1] : vector<64x16xf32> to vector<64xf32>
    %168 = vector.shape_cast %167 : vector<64xf32> to vector<64x1xf32>
    %169 = tpu.reciprocal %168 {approx = true} : vector<64x1xf32> -> vector<64x1xf32>
    %170 = vector.broadcast %169 : vector<64x1xf32> to vector<64x16xf32>
    %171 = arith.mulf %166, %170 : vector<64x16xf32>
    %cst_69 = arith.constant dense<0.000000e+00> : vector<64x32xf32>
    %172 = tpu.matmul %171, %157, %cst_69 {dimension_numbers = #tpu.dot_dimension_numbers<[1], [0], [0], [1], [0, 0, 1, 1], [], []>} : vector<64x16xf32>, vector<16x32xf32>, vector<64x32xf32> -> vector<64x32xf32>
    %173 = arith.mulf %172, %0 : vector<64x32xf32>
    %174 = vector.extract_strided_slice %173 {offsets = [0, 0], sizes = [16, 32], strides = [1, 1]} : vector<64x32xf32> to vector<16x32xf32>
    %175 = vector.extract_strided_slice %173 {offsets = [16, 0], sizes = [16, 32], strides = [1, 1]} : vector<64x32xf32> to vector<16x32xf32>
    %176 = arith.addf %174, %175 : vector<16x32xf32>
    %177 = vector.extract_strided_slice %173 {offsets = [32, 0], sizes = [16, 32], strides = [1, 1]} : vector<64x32xf32> to vector<16x32xf32>
    %178 = arith.addf %176, %177 : vector<16x32xf32>
    %179 = vector.extract_strided_slice %173 {offsets = [48, 0], sizes = [16, 32], strides = [1, 1]} : vector<64x32xf32> to vector<16x32xf32>
    %180 = arith.addf %178, %179 : vector<16x32xf32>
    %cst_70 = arith.constant dense<0.000000e+00> : vector<16x32xf32>
    %181 = tpu.matmul %180, %146, %cst_70 {dimension_numbers = #tpu.dot_dimension_numbers<[1], [0], [0], [1], [0, 0, 1, 1], [], []>} : vector<16x32xf32>, vector<32x32xf32>, vector<16x32xf32> -> vector<16x32xf32>
    %c13 = arith.constant 13 : index
    %c0_71 = arith.constant 0 : index
    %182 = vector.load %arg1[%c13, %c0_71] : memref<21x128xf32, #tpu.memory_space<vmem>>, vector<1x32xf32>
    %183 = vector.broadcast %182 : vector<1x32xf32> to vector<16x32xf32>
    %184 = arith.addf %181, %183 : vector<16x32xf32>
    %185 = arith.addf %142, %184 : vector<16x32xf32>
    %c14 = arith.constant 14 : index
    %c0_72 = arith.constant 0 : index
    %186 = vector.load %arg1[%c14, %c0_72] : memref<21x128xf32, #tpu.memory_space<vmem>>, vector<1x32xf32>
    %c15 = arith.constant 15 : index
    %c0_73 = arith.constant 0 : index
    %187 = vector.load %arg1[%c15, %c0_73] : memref<21x128xf32, #tpu.memory_space<vmem>>, vector<1x32xf32>
    %cst_74 = arith.constant dense<0.000000e+00> : vector<16xf32>
    %188 = vector.multi_reduction <add>, %185, %cst_74 [1] : vector<16x32xf32> to vector<16xf32>
    %189 = vector.shape_cast %188 : vector<16xf32> to vector<16x1xf32>
    %cst_75 = arith.constant 3.200000e+01 : f32
    %190 = vector.broadcast %cst_75 : f32 to vector<16x1xf32>
    %191 = arith.divf %189, %190 : vector<16x1xf32>
    %192 = arith.mulf %185, %185 : vector<16x32xf32>
    %cst_76 = arith.constant dense<0.000000e+00> : vector<16xf32>
    %193 = vector.multi_reduction <add>, %192, %cst_76 [1] : vector<16x32xf32> to vector<16xf32>
    %194 = vector.shape_cast %193 : vector<16xf32> to vector<16x1xf32>
    %cst_77 = arith.constant 3.200000e+01 : f32
    %195 = vector.broadcast %cst_77 : f32 to vector<16x1xf32>
    %196 = arith.divf %194, %195 : vector<16x1xf32>
    %197 = arith.mulf %191, %191 : vector<16x1xf32>
    %198 = arith.subf %196, %197 : vector<16x1xf32>
    %199 = vector.broadcast %191 : vector<16x1xf32> to vector<16x32xf32>
    %200 = arith.subf %185, %199 : vector<16x32xf32>
    %cst_78 = arith.constant 9.99999996E-13 : f32
    %201 = vector.broadcast %cst_78 : f32 to vector<16x1xf32>
    %202 = arith.addf %198, %201 : vector<16x1xf32>
    %203 = math.rsqrt %202 : vector<16x1xf32>
    %204 = vector.broadcast %203 : vector<16x1xf32> to vector<16x32xf32>
    %205 = arith.mulf %200, %204 : vector<16x32xf32>
    %206 = vector.broadcast %186 : vector<1x32xf32> to vector<16x32xf32>
    %207 = arith.mulf %205, %206 : vector<16x32xf32>
    %208 = vector.broadcast %187 : vector<1x32xf32> to vector<16x32xf32>
    %209 = arith.addf %207, %208 : vector<16x32xf32>
    %cst_79 = arith.constant dense<0.000000e+00> : vector<16x64xf32>
    %210 = tpu.matmul %209, %148, %cst_79 {dimension_numbers = #tpu.dot_dimension_numbers<[1], [0], [0], [1], [0, 0, 1, 1], [], []>} : vector<16x32xf32>, vector<32x64xf32>, vector<16x64xf32> -> vector<16x64xf32>
    %c16_80 = arith.constant 16 : index
    %c0_81 = arith.constant 0 : index
    %211 = vector.load %arg1[%c16_80, %c0_81] : memref<21x128xf32, #tpu.memory_space<vmem>>, vector<1x64xf32>
    %212 = vector.broadcast %211 : vector<1x64xf32> to vector<16x64xf32>
    %213 = arith.addf %210, %212 : vector<16x64xf32>
    %cst_82 = arith.constant 5.000000e-01 : f32
    %214 = vector.broadcast %cst_82 : f32 to vector<16x64xf32>
    %215 = arith.mulf %214, %213 : vector<16x64xf32>
    %cst_83 = arith.constant 4.471500e-02 : f32
    %216 = vector.broadcast %cst_83 : f32 to vector<16x64xf32>
    %217 = arith.mulf %216, %213 : vector<16x64xf32>
    %218 = arith.mulf %217, %213 : vector<16x64xf32>
    %219 = arith.mulf %218, %213 : vector<16x64xf32>
    %220 = arith.addf %213, %219 : vector<16x64xf32>
    %cst_84 = arith.constant 0.797884583 : f32
    %221 = vector.broadcast %cst_84 : f32 to vector<16x64xf32>
    %222 = arith.mulf %221, %220 : vector<16x64xf32>
    %223 = math.tanh %222 : vector<16x64xf32>
    %cst_85 = arith.constant 1.000000e+00 : f32
    %224 = vector.broadcast %cst_85 : f32 to vector<16x64xf32>
    %225 = arith.addf %224, %223 : vector<16x64xf32>
    %226 = arith.mulf %215, %225 : vector<16x64xf32>
    %cst_86 = arith.constant dense<0.000000e+00> : vector<16x32xf32>
    %227 = tpu.matmul %226, %150, %cst_86 {dimension_numbers = #tpu.dot_dimension_numbers<[1], [0], [0], [1], [0, 0, 1, 1], [], []>} : vector<16x64xf32>, vector<64x32xf32>, vector<16x32xf32> -> vector<16x32xf32>
    %c17 = arith.constant 17 : index
    %c0_87 = arith.constant 0 : index
    %228 = vector.load %arg1[%c17, %c0_87] : memref<21x128xf32, #tpu.memory_space<vmem>>, vector<1x32xf32>
    %229 = vector.broadcast %228 : vector<1x32xf32> to vector<16x32xf32>
    %230 = arith.addf %227, %229 : vector<16x32xf32>
    %231 = arith.addf %209, %230 : vector<16x32xf32>
    %c18 = arith.constant 18 : index
    %c0_88 = arith.constant 0 : index
    %232 = vector.load %arg1[%c18, %c0_88] : memref<21x128xf32, #tpu.memory_space<vmem>>, vector<1x32xf32>
    %c19 = arith.constant 19 : index
    %c0_89 = arith.constant 0 : index
    %233 = vector.load %arg1[%c19, %c0_89] : memref<21x128xf32, #tpu.memory_space<vmem>>, vector<1x32xf32>
    %cst_90 = arith.constant dense<0.000000e+00> : vector<16xf32>
    %234 = vector.multi_reduction <add>, %231, %cst_90 [1] : vector<16x32xf32> to vector<16xf32>
    %235 = vector.shape_cast %234 : vector<16xf32> to vector<16x1xf32>
    %cst_91 = arith.constant 3.200000e+01 : f32
    %236 = vector.broadcast %cst_91 : f32 to vector<16x1xf32>
    %237 = arith.divf %235, %236 : vector<16x1xf32>
    %238 = arith.mulf %231, %231 : vector<16x32xf32>
    %cst_92 = arith.constant dense<0.000000e+00> : vector<16xf32>
    %239 = vector.multi_reduction <add>, %238, %cst_92 [1] : vector<16x32xf32> to vector<16xf32>
    %240 = vector.shape_cast %239 : vector<16xf32> to vector<16x1xf32>
    %cst_93 = arith.constant 3.200000e+01 : f32
    %241 = vector.broadcast %cst_93 : f32 to vector<16x1xf32>
    %242 = arith.divf %240, %241 : vector<16x1xf32>
    %243 = arith.mulf %237, %237 : vector<16x1xf32>
    %244 = arith.subf %242, %243 : vector<16x1xf32>
    %245 = vector.broadcast %237 : vector<16x1xf32> to vector<16x32xf32>
    %246 = arith.subf %231, %245 : vector<16x32xf32>
    %cst_94 = arith.constant 9.99999996E-13 : f32
    %247 = vector.broadcast %cst_94 : f32 to vector<16x1xf32>
    %248 = arith.addf %244, %247 : vector<16x1xf32>
    %249 = math.rsqrt %248 : vector<16x1xf32>
    %250 = vector.broadcast %249 : vector<16x1xf32> to vector<16x32xf32>
    %251 = arith.mulf %246, %250 : vector<16x32xf32>
    %252 = vector.broadcast %232 : vector<1x32xf32> to vector<16x32xf32>
    %253 = arith.mulf %251, %252 : vector<16x32xf32>
    %254 = vector.broadcast %233 : vector<1x32xf32> to vector<16x32xf32>
    %255 = arith.addf %253, %254 : vector<16x32xf32>
    %256 = vector.extract_strided_slice %255 {offsets = [0, 0], sizes = [1, 32], strides = [1, 1]} : vector<16x32xf32> to vector<1x32xf32>
    %257 = vector.extract_strided_slice %255 {offsets = [8, 0], sizes = [1, 32], strides = [1, 1]} : vector<16x32xf32> to vector<1x32xf32>
    %258 = tpu.concatenate %256, %257 in 0 : vector<1x32xf32>, vector<1x32xf32> -> vector<2x32xf32>
    %c2 = arith.constant 2 : index
    %c0_95 = arith.constant 0 : index
    %c0_96 = arith.constant 0 : index
    %259 = vector.load %arg3[%c2, %c0_95, %c0_96] : memref<3x32x192xf32, #tpu.memory_space<vmem>>, vector<1x32x32xf32>
    %260 = vector.shape_cast %259 : vector<1x32x32xf32> to vector<32x32xf32>
    %c2_97 = arith.constant 2 : index
    %c0_98 = arith.constant 0 : index
    %c32 = arith.constant 32 : index
    %261 = vector.load %arg3[%c2_97, %c0_98, %c32] : memref<3x32x192xf32, #tpu.memory_space<vmem>>, vector<1x32x5xf32>
    %262 = vector.shape_cast %261 : vector<1x32x5xf32> to vector<32x5xf32>
    %cst_99 = arith.constant dense<0.000000e+00> : vector<2x32xf32>
    %263 = tpu.matmul %258, %260, %cst_99 {dimension_numbers = #tpu.dot_dimension_numbers<[1], [0], [0], [1], [0, 0, 1, 1], [], []>} : vector<2x32xf32>, vector<32x32xf32>, vector<2x32xf32> -> vector<2x32xf32>
    %c2_100 = arith.constant 2 : index
    %c0_101 = arith.constant 0 : index
    %264 = vector.load %arg1[%c2_100, %c0_101] : memref<21x128xf32, #tpu.memory_space<vmem>>, vector<1x32xf32>
    %265 = vector.broadcast %264 : vector<1x32xf32> to vector<2x32xf32>
    %266 = arith.addf %263, %265 : vector<2x32xf32>
    %267 = math.tanh %266 : vector<2x32xf32>
    %cst_102 = arith.constant dense<0.000000e+00> : vector<2x5xf32>
    %268 = tpu.matmul %267, %262, %cst_102 {dimension_numbers = #tpu.dot_dimension_numbers<[1], [0], [0], [1], [0, 0, 1, 1], [], []>} : vector<2x32xf32>, vector<32x5xf32>, vector<2x5xf32> -> vector<2x5xf32>
    %c3 = arith.constant 3 : index
    %c0_103 = arith.constant 0 : index
    %269 = vector.load %arg1[%c3, %c0_103] : memref<21x128xf32, #tpu.memory_space<vmem>>, vector<1x5xf32>
    %270 = vector.broadcast %269 : vector<1x5xf32> to vector<2x5xf32>
    %271 = arith.addf %268, %270 : vector<2x5xf32>
    %c0_104 = arith.constant 0 : index
    %c0_105 = arith.constant 0 : index
    %272 = vector.load %arg5[%c0_104, %c0_105] : memref<2x5xf32, #tpu.memory_space<vmem>>, vector<2x5xf32>
    tpu.vector_store %arg5[%c0_104, %c0_105], %271 {strides = array<i32>} : memref<2x5xf32, #tpu.memory_space<vmem>>, vector<2x5xf32>,
    return
  }
}

</mosaic_0001>

<llo_original>
// kernel: tpu_custom_call.1
$region0: #{tpu_custom_call.1}
  #allocation0 [shape = 'u32[]', space=smem, size = 0x4, offset = 0x4, fixed_abs, tag = 'smem constant byte address 0x4 - core index']
  #allocation1 [shape = 'u32[144,128]{1,0:T(1,128)}', space=vmem, size = 0x12000, scoped, tag = 'internal scratch']
  %s0 = inlined_call_operand.vmem [shape: f32[16,32], index: 0, kind: input, shape index: {}]
  %s1 = inlined_call_operand.vmem [shape: f32[21,128], index: 1, kind: input, shape index: {}]
  %s2 = inlined_call_operand.vmem [shape: f32[64,48], index: 2, kind: input, shape index: {}]
  %s3 = inlined_call_operand.vmem [shape: f32[3,32,192], index: 3, kind: input, shape index: {}]
  %s4 = inlined_call_operand.vmem [shape: f32[2,64,32], index: 4, kind: input, shape index: {}]
  %s5 = inlined_call_operand.hbm [shape: f32[2,5], index: 5, kind: output, shape index: {}]
  %s6 = sld [smem:[#allocation0]]
  $region30: #{tpu_custom_call.1} parent=0
    _
  %s8 = ssub.s32 1, %s6
  %s9 = scalar_select 0, %s8, %s6
  $region1: #{tpu_custom_call.1} parent=0
    #allocation2 [shape = 'u8[1024]{0}', space=vmem, size = 0x400, scoped, tag = 'output window, operand 0, single buffered']
    #allocation3 [shape = 's32[1]{0}', space=sflag, size = 0x4, scoped, tag = 'scoped memory for tpu_custom_call.1']
    %10 = vsyncpa [#allocation3], 0
    // Predicated region
    $region2: #{tpu_custom_call.1} parent=1 // pred_check
      _
    $region3: #{tpu_custom_call.1} parent=1 // pred_check_branch
      %12 = sbr.rel (0) target = $region5
    $region4: #{tpu_custom_call.1} parent=1 // pred_region
      _
    $region5: #{tpu_custom_call.1} parent=1 // pred_fallthru
      _
    // Predicated region
    $region6: #{tpu_custom_call.1} parent=1 // pred_check
      _
    $region7: #{tpu_custom_call.1} parent=1 // pred_check_branch
      %14 = sbr.rel (0) target = $region9
    $region8: #{tpu_custom_call.1} parent=1 // pred_region
      _
    $region9: #{tpu_custom_call.1} parent=1 // pred_fallthru
      _
    // Predicated region
    $region10: #{tpu_custom_call.1} parent=1 // pred_check
      _
    $region11: #{tpu_custom_call.1} parent=1 // pred_check_branch
      %16 = sbr.rel (0) target = $region13
    $region12: #{tpu_custom_call.1} parent=1 // pred_region
      _
    $region13: #{tpu_custom_call.1} parent=1 // pred_fallthru
      _
    // Predicated region
    $region14: #{tpu_custom_call.1} parent=1 // pred_check
      _
    $region15: #{tpu_custom_call.1} parent=1 // pred_check_branch
      %18 = sbr.rel (0) target = $region17
    $region16: #{tpu_custom_call.1} parent=1 // pred_region
      _
    $region17: #{tpu_custom_call.1} parent=1 // pred_fallthru
      _
    // Predicated region
    $region18: #{tpu_custom_call.1} parent=1 // pred_check
      _
    $region19: #{tpu_custom_call.1} parent=1 // pred_check_branch
      %20 = sbr.rel (0) target = $region21
    $region20: #{tpu_custom_call.1} parent=1 // pred_region
      _
    $region21: #{tpu_custom_call.1} parent=1 // pred_fallthru
      _
    %v21 = vld [vmem:[%s2] sm:$0xff]
    %v22 = vld [vmem:[%s2 + $0x8] sm:$0xff]
    %v23 = vld [vmem:[%s2 + $0x10] sm:$0xff]
    %v24 = vld [vmem:[%s2 + $0x18] sm:$0xff]
    %v25 = vld [vmem:[%s2 + $0x20] sm:$0xff]
    %v26 = vld [vmem:[%s2 + $0x28] sm:$0xff]
    %v27 = vld [vmem:[%s2 + $0x30] sm:$0xff]
    %v28 = vld [vmem:[%s2 + $0x38] sm:$0xff]
    %v29 = vld [vmem:[%s1 + $0x14] sm:$0x1]
    %v30 = vlaneseq
    %v31 = vshrl.u32 %v30, 7
    %v32 = vsub.s32 0, %v31
    %v33 = vrot.slane %v29, %v32
    %v34 = vadd.f32 %v21, %v33
    %v35 = vadd.f32 %v22, %v33
    %v36 = vadd.f32 %v23, %v33
    %v37 = vadd.f32 %v24, %v33
    %v38 = vadd.f32 %v25, %v33
    %v39 = vadd.f32 %v26, %v33
    %v40 = vadd.f32 %v27, %v33
    %v41 = vadd.f32 %v28, %v33
    %v42 = vld [vmem:[%s0] sm:$0xff]
    %v43 = vld [vmem:[%s0 + $0x8] sm:$0xff]
    %v44 = vld [vmem:[%s1] sm:$0x1]
    %v45 = vld [vmem:[%s1 + $0x1] sm:$0x1]
    %vm46 = vcmask 261120
    %v47 = vsel %vm46, %v42, 0.0
    %48 = vadd.xlane.f32.xlu0 %v47
    %v49 = vpop.xlane.xlu0 %48
    %v50 = vsel %vm46, %v43, 0.0
    %51 = vadd.xlane.f32.xlu0 %v50
    %v52 = vpop.xlane.xlu0 %51
    %v53 = vrcp.pop 32.0
    %v54 = vmul.f32 %v49, %v53
    %v55 = vmul.f32 %v52, %v53
    %v56 = vmul.f32 %v42, %v42
    %v57 = vmul.f32 %v43, %v43
    %v58 = vsel %vm46, %v56, 0.0
    %59 = vadd.xlane.f32.xlu0 %v58
    %v60 = vpop.xlane.xlu0 %59
    %v61 = vsel %vm46, %v57, 0.0
    %62 = vadd.xlane.f32.xlu0 %v61
    %v63 = vpop.xlane.xlu0 %62
    %v64 = vmul.f32 %v60, %v53
    %v65 = vmul.f32 %v63, %v53
    %v66 = vmul.f32 %v54, %v54
    %v67 = vmul.f32 %v55, %v55
    %v68 = vsub.f32 %v64, %v66
    %v69 = vsub.f32 %v65, %v67
    %v70 = vsub.f32 %v42, %v54
    %v71 = vsub.f32 %v43, %v55
    %v72 = vadd.f32 %v68, 1e-12
    %v73 = vadd.f32 %v69, 1e-12
    %v74 = vrsqrt.pop %v72
    %v75 = vrsqrt.pop %v73
    %v76 = vmul.f32 %v70, %v74
    %v77 = vmul.f32 %v71, %v75
    %v78 = vlaneseq
    %v79 = vshrl.u32 %v78, 7
    %v80 = vsub.s32 0, %v79
    %v81 = vrot.slane %v44, %v80
    %v82 = vmul.f32 %v76, %v81
    %v83 = vmul.f32 %v77, %v81
    %v84 = vlaneseq
    %v85 = vshrl.u32 %v84, 7
    %v86 = vsub.s32 0, %v85
    %v87 = vrot.slane %v45, %v86
    %v88 = vadd.f32 %v82, %v87
    %v89 = vadd.f32 %v83, %v87
    %v90 = vld [vmem:[%s3] sm:$0xff]
    %v91 = vld [vmem:[%s3 + $0x10] sm:$0xff]
    %v92 = vld [vmem:[%s3 + $0x20] sm:$0xff]
    %v93 = vld [vmem:[%s3 + $0x30] sm:$0xff]
    %v94 = vld [vmem:[%s3 + $0x8] sm:$0xff]
    %v95 = vld [vmem:[%s3 + $0x18] sm:$0xff]
    %v96 = vld [vmem:[%s3 + $0x28] sm:$0xff]
    %v97 = vld [vmem:[%s3 + $0x38] sm:$0xff]
    %v98 = vld [vmem:[%s4] sm:$0xff]
    %v99 = vld [vmem:[%s4 + $0x8] sm:$0xff]
    %v100 = vld [vmem:[%s4 + $0x10] sm:$0xff]
    %v101 = vld [vmem:[%s4 + $0x18] sm:$0xff]
    %v102 = vld [vmem:[%s4 + $0x20] sm:$0xff]
    %v103 = vld [vmem:[%s4 + $0x28] sm:$0xff]
    %v104 = vld [vmem:[%s4 + $0x30] sm:$0xff]
    %v105 = vld [vmem:[%s4 + $0x38] sm:$0xff]
    %v106 = vld [vmem:[%s1 + $0x4] sm:$0x1]
    %v107 = vlaneseq
    %v108 = vshrl.u32 %v107, 7
    %v109 = vsub.s32 0, %v108
    %v110 = vrot.slane %v106, %v109
    %v112 = vsel %vm46, %v88, 0
    %v115 = vsel %vm46, %v89, 0
    %117 = vmatprep.subr.mxu0 0.0
    %118 = vmatpush1.msra.mxu0 0.0
    %119 = vmatprep.subr.mxu0 0.0
    %120 = vmatpush1.msra.mxu0 0.0
    %121 = vmatprep.subr.mxu0 0.0
    %122 = vmatpush1.msra.mxu0 0.0
    %123 = vmatprep.subr.mxu0 0.0
    %124 = vmatpush1.msra.mxu0 0.0
    %125 = vmatprep.subr.mxu0 0.0
    %126 = vmatpush1.msra.mxu0 0.0
    %127 = vmatprep.subr.mxu0 0.0
    %128 = vmatpush1.msra.mxu0 0.0
    %129 = vmatprep.subr.mxu0 0.0
    %130 = vmatpush1.msra.mxu0 0.0
    %131 = vmatprep.subr.mxu0 0.0
    %132 = vmatpush1.msra.mxu0 0.0
    %133 = vmatprep.subr.mxu0 0.0
    %134 = vmatpush1.msra.mxu0 0.0
    %135 = vmatprep.subr.mxu0 0.0
    %136 = vmatpush1.msra.mxu0 0.0
    %137 = vmatprep.subr.mxu0 0.0
    %138 = vmatpush1.msra.mxu0 0.0
    %139 = vmatprep.subr.mxu0 0.0
    %140 = vmatpush1.msra.mxu0 0.0
    %141 = vmatprep.subr.mxu0 0.0
    %142 = vmatpush1.msra.mxu0 %v93
    %143 = vmatprep.subr.mxu0 0.0
    %144 = vmatpush1.msra.mxu0 %v92
    %145 = vmatprep.subr.mxu0 0.0
    %146 = vmatpush1.msra.mxu0 %v91
    %147 = vmatprep.subr.mxu0 0.0
    %148 = vmatpush1.msra.mxu0 %v90
    %149 = vmatprep.subr.mxu0 0.0
    %150 = vmatpush2.msra.mxu0 0.0
    %151 = vmatprep.subr.mxu0 0.0
    %152 = vmatpush2.msra.mxu0 0.0
    %153 = vmatprep.subr.mxu0 0.0
    %154 = vmatpush2.msra.mxu0 0.0
    %155 = vmatprep.subr.mxu0 0.0
    %156 = vmatpush2.msra.mxu0 0.0
    %157 = vmatprep.subr.mxu0 0.0
    %158 = vmatpush2.msra.mxu0 0.0
    %159 = vmatprep.subr.mxu0 0.0
    %160 = vmatpush2.msra.mxu0 0.0
    %161 = vmatprep.subr.mxu0 0.0
    %162 = vmatpush2.msra.mxu0 0.0
    %163 = vmatprep.subr.mxu0 0.0
    %164 = vmatpush2.msra.mxu0 0.0
    %165 = vmatprep.subr.mxu0 0.0
    %166 = vmatpush2.msra.mxu0 0.0
    %167 = vmatprep.subr.mxu0 0.0
    %168 = vmatpush2.msra.mxu0 0.0
    %169 = vmatprep.subr.mxu0 0.0
    %170 = vmatpush2.msra.mxu0 0.0
    %171 = vmatprep.subr.mxu0 0.0
    %172 = vmatpush2.msra.mxu0 0.0
    %173 = vmatprep.subr.mxu0 0.0
    %174 = vmatpush2.msra.mxu0 0.0
    %175 = vmatprep.subr.mxu0 0.0
    %176 = vmatpush2.msra.mxu0 0.0
    %177 = vmatprep.subr.mxu0 0.0
    %178 = vmatpush2.msra.mxu0 0.0
    %179 = vmatprep.subr.mxu0 0.0
    %180 = vmatpush2.msra.mxu0 0.0
    %181 = vmatprep.mubr.f32.mxu0 0.0
    %182 = vmatmul.mubr.f32.gmra.mxu0 %v112
    %v183 = vpop.f32.mrf.mxu0
    %v184 = vadd.f32 %v110, %v183
    %v185 = vpop.f32.mrf.mxu0
    %186 = vmatprep.mubr.f32.mxu0 0.0
    %187 = vmatmul.mubr.f32.gmra.mxu0 %v115
    %v188 = vpop.f32.mrf.mxu0
    %v189 = vadd.f32 %v110, %v188
    %v190 = vpop.f32.mrf.mxu0
    %191 = vdwg.mxu0
    %200 = vrot.lane.b32.xlu0 %v21, 112
    %v201 = vpop.permute.xlu0 %200
    %202 = vrot.lane.b32.xlu0 %v22, 112
    %v203 = vpop.permute.xlu0 %202
    %204 = vrot.lane.b32.xlu0 %v23, 112
    %v205 = vpop.permute.xlu0 %204
    %206 = vrot.lane.b32.xlu0 %v24, 112
    %v207 = vpop.permute.xlu0 %206
    %208 = vrot.lane.b32.xlu0 %v25, 112
    %v209 = vpop.permute.xlu0 %208
    %210 = vrot.lane.b32.xlu0 %v26, 112
    %v211 = vpop.permute.xlu0 %210
    %212 = vrot.lane.b32.xlu0 %v27, 112
    %v213 = vpop.permute.xlu0 %212
    %214 = vrot.lane.b32.xlu0 %v28, 112
    %v215 = vpop.permute.xlu0 %214
    %v224 = vmul.f32 %v184, %v201
    %v225 = vmul.f32 %v189, %v203
    %v226 = vmul.f32 %v184, %v205
    %v227 = vmul.f32 %v189, %v207
    %v228 = vmul.f32 %v184, %v209
    %v229 = vmul.f32 %v189, %v211
    %v230 = vmul.f32 %v184, %v213
    %v231 = vmul.f32 %v189, %v215
    %234 = vrot.lane.b32.xlu0 %v184, 96
    %v235 = vpop.permute.xlu0 %234
    %236 = vrot.lane.b32.xlu0 %v189, 96
    %v237 = vpop.permute.xlu0 %236
    %v239 = vsel %vm46, %v224, 0
    %v242 = vsel %vm46, %v225, 0
    %v245 = vsel %vm46, %v226, 0
    %v248 = vsel %vm46, %v227, 0
    %v251 = vsel %vm46, %v228, 0
    %v254 = vsel %vm46, %v229, 0
    %v257 = vsel %vm46, %v230, 0
    %v260 = vsel %vm46, %v231, 0
    %v262 = vsel %vm46, %v235, 0
    %v264 = vsel %vm46, %v237, 0
    %266 = vmatprep.subr.mxu0 0.0
    %267 = vmatpush1.xpose.msra.mxu0 0.0
    %268 = vmatprep.subr.mxu0 0.0
    %269 = vmatpush1.xpose.msra.mxu0 0.0
    %270 = vmatprep.subr.mxu0 0.0
    %271 = vmatpush1.xpose.msra.mxu0 0.0
    %272 = vmatprep.subr.mxu0 0.0
    %273 = vmatpush1.xpose.msra.mxu0 0.0
    %274 = vmatprep.subr.mxu0 0.0
    %275 = vmatpush1.xpose.msra.mxu0 0.0
    %276 = vmatprep.subr.mxu0 0.0
    %277 = vmatpush1.xpose.msra.mxu0 0.0
    %278 = vmatprep.subr.mxu0 0.0
    %279 = vmatpush1.xpose.msra.mxu0 0.0
    %280 = vmatprep.subr.mxu0 0.0
    %281 = vmatpush1.xpose.msra.mxu0 0.0
    %282 = vmatprep.subr.mxu0 0.0
    %283 = vmatpush1.xpose.msra.mxu0 0.0
    %284 = vmatprep.subr.mxu0 0.0
    %285 = vmatpush1.xpose.msra.mxu0 0.0
    %286 = vmatprep.subr.mxu0 0.0
    %287 = vmatpush1.xpose.msra.mxu0 0.0
    %288 = vmatprep.subr.mxu0 0.0
    %289 = vmatpush1.xpose.msra.mxu0 0.0
    %290 = vmatprep.subr.mxu0 0.0
    %291 = vmatpush1.xpose.msra.mxu0 0.0
    %292 = vmatprep.subr.mxu0 0.0
    %293 = vmatpush1.xpose.msra.mxu0 0.0
    %294 = vmatprep.subr.mxu0 0.0
    %295 = vmatpush1.xpose.msra.mxu0 %v264
    %296 = vmatprep.subr.mxu0 0.0
    %297 = vmatpush1.xpose.msra.mxu0 %v262
    %298 = vmatprep.subr.mxu0 0.0
    %299 = vmatpush2.xpose.msra.mxu0 0.0
    %300 = vmatprep.subr.mxu0 0.0
    %301 = vmatpush2.xpose.msra.mxu0 0.0
    %302 = vmatprep.subr.mxu0 0.0
    %303 = vmatpush2.xpose.msra.mxu0 0.0
    %304 = vmatprep.subr.mxu0 0.0
    %305 = vmatpush2.xpose.msra.mxu0 0.0
    %306 = vmatprep.subr.mxu0 0.0
    %307 = vmatpush2.xpose.msra.mxu0 0.0
    %308 = vmatprep.subr.mxu0 0.0
    %309 = vmatpush2.xpose.msra.mxu0 0.0
    %310 = vmatprep.subr.mxu0 0.0
    %311 = vmatpush2.xpose.msra.mxu0 0.0
    %312 = vmatprep.subr.mxu0 0.0
    %313 = vmatpush2.xpose.msra.mxu0 0.0
    %314 = vmatprep.subr.mxu0 0.0
    %315 = vmatpush2.xpose.msra.mxu0 0.0
    %316 = vmatprep.subr.mxu0 0.0
    %317 = vmatpush2.xpose.msra.mxu0 0.0
    %318 = vmatprep.subr.mxu0 0.0
    %319 = vmatpush2.xpose.msra.mxu0 0.0
    %320 = vmatprep.subr.mxu0 0.0
    %321 = vmatpush2.xpose.msra.mxu0 0.0
    %322 = vmatprep.subr.mxu0 0.0
    %323 = vmatpush2.xpose.msra.mxu0 0.0
    %324 = vmatprep.subr.mxu0 0.0
    %325 = vmatpush2.xpose.msra.mxu0 0.0
    %326 = vmatprep.subr.mxu0 0.0
    %327 = vmatpush2.xpose.msra.mxu0 0.0
    %328 = vmatprep.subr.mxu0 0.0
    %329 = vmatpush2.xpose.msra.mxu0 0.0
    %330 = vmatprep.mubr.f32.mxu0 0.0
    %331 = vmatmul.mubr.f32.gmra.mxu0 %v239
    %v332 = vpop.f32.mrf.mxu0
    %v333 = vadd.f32 %v34, %v332
    %v334 = vpop.f32.mrf.mxu0
    %335 = vmatprep.mubr.f32.mxu0 0.0
    %336 = vmatmul.mubr.f32.gmra.mxu0 %v242
    %v337 = vpop.f32.mrf.mxu0
    %v338 = vadd.f32 %v35, %v337
    %v339 = vpop.f32.mrf.mxu0
    %340 = vmatprep.mubr.f32.mxu0 0.0
    %341 = vmatmul.mubr.f32.gmra.mxu0 %v245
    %v342 = vpop.f32.mrf.mxu0
    %v343 = vadd.f32 %v36, %v342
    %v344 = vpop.f32.mrf.mxu0
    %345 = vmatprep.mubr.f32.mxu0 0.0
    %346 = vmatmul.mubr.f32.gmra.mxu0 %v248
    %v347 = vpop.f32.mrf.mxu0
    %v348 = vadd.f32 %v37, %v347
    %v349 = vpop.f32.mrf.mxu0
    %350 = vmatprep.mubr.f32.mxu0 0.0
    %351 = vmatmul.mubr.f32.gmra.mxu0 %v251
    %v352 = vpop.f32.mrf.mxu0
    %v353 = vadd.f32 %v38, %v352
    %v354 = vpop.f32.mrf.mxu0
    %355 = vmatprep.mubr.f32.mxu0 0.0
    %356 = vmatmul.mubr.f32.gmra.mxu0 %v254
    %v357 = vpop.f32.mrf.mxu0
    %v358 = vadd.f32 %v39, %v357
    %v359 = vpop.f32.mrf.mxu0
    %360 = vmatprep.mubr.f32.mxu0 0.0
    %361 = vmatmul.mubr.f32.gmra.mxu0 %v257
    %v362 = vpop.f32.mrf.mxu0
    %v363 = vadd.f32 %v40, %v362
    %v364 = vpop.f32.mrf.mxu0
    %365 = vmatprep.mubr.f32.mxu0 0.0
    %366 = vmatmul.mubr.f32.gmra.mxu0 %v260
    %v367 = vpop.f32.mrf.mxu0
    %v368 = vadd.f32 %v41, %v367
    %v369 = vpop.f32.mrf.mxu0
    %370 = vdwg.mxu0
    %vm371 = vcmask 130048
    %v372 = vsel %vm371, %v333, -inf
    %373 = vmax.xlane.f32.xlu0 %v372
    %v374 = vpop.xlane.xlu0 %373
    %v375 = vsel %vm371, %v338, -inf
    %376 = vmax.xlane.f32.xlu0 %v375
    %v377 = vpop.xlane.xlu0 %376
    %v378 = vsel %vm371, %v343, -inf
    %379 = vmax.xlane.f32.xlu0 %v378
    %v380 = vpop.xlane.xlu0 %379
    %v381 = vsel %vm371, %v348, -inf
    %382 = vmax.xlane.f32.xlu0 %v381
    %v383 = vpop.xlane.xlu0 %382
    %v384 = vsel %vm371, %v353, -inf
    %385 = vmax.xlane.f32.xlu0 %v384
    %v386 = vpop.xlane.xlu0 %385
    %v387 = vsel %vm371, %v358, -inf
    %388 = vmax.xlane.f32.xlu0 %v387
    %v389 = vpop.xlane.xlu0 %388
    %v390 = vsel %vm371, %v363, -inf
    %391 = vmax.xlane.f32.xlu0 %v390
    %v392 = vpop.xlane.xlu0 %391
    %v393 = vsel %vm371, %v368, -inf
    %394 = vmax.xlane.f32.xlu0 %v393
    %v395 = vpop.xlane.xlu0 %394
    %v396 = vsub.f32 %v333, %v374
    %v397 = vsub.f32 %v338, %v377
    %v398 = vsub.f32 %v343, %v380
    %v399 = vsub.f32 %v348, %v383
    %v400 = vsub.f32 %v353, %v386
    %v401 = vsub.f32 %v358, %v389
    %v402 = vsub.f32 %v363, %v392
    %v403 = vsub.f32 %v368, %v395
    %v404 = vmul.f32 %v396, 1.442695
    %v405 = vpow.pop %v404
    %v406 = vmul.f32 %v397, 1.442695
    %v407 = vpow.pop %v406
    %v408 = vmul.f32 %v398, 1.442695
    %v409 = vpow.pop %v408
    %v410 = vmul.f32 %v399, 1.442695
    %v411 = vpow.pop %v410
    %v412 = vmul.f32 %v400, 1.442695
    %v413 = vpow.pop %v412
    %v414 = vmul.f32 %v401, 1.442695
    %v415 = vpow.pop %v414
    %v416 = vmul.f32 %v402, 1.442695
    %v417 = vpow.pop %v416
    %v418 = vmul.f32 %v403, 1.442695
    %v419 = vpow.pop %v418
    %v420 = vsel %vm371, %v405, 0.0
    %421 = vadd.xlane.f32.xlu0 %v420
    %v422 = vpop.xlane.xlu0 %421
    %v423 = vsel %vm371, %v407, 0.0
    %424 = vadd.xlane.f32.xlu0 %v423
    %v425 = vpop.xlane.xlu0 %424
    %v426 = vsel %vm371, %v409, 0.0
    %427 = vadd.xlane.f32.xlu0 %v426
    %v428 = vpop.xlane.xlu0 %427
    %v429 = vsel %vm371, %v411, 0.0
    %430 = vadd.xlane.f32.xlu0 %v429
    %v431 = vpop.xlane.xlu0 %430
    %v432 = vsel %vm371, %v413, 0.0
    %433 = vadd.xlane.f32.xlu0 %v432
    %v434 = vpop.xlane.xlu0 %433
    %v435 = vsel %vm371, %v415, 0.0
    %436 = vadd.xlane.f32.xlu0 %v435
    %v437 = vpop.xlane.xlu0 %436
    %v438 = vsel %vm371, %v417, 0.0
    %439 = vadd.xlane.f32.xlu0 %v438
    %v440 = vpop.xlane.xlu0 %439
    %v441 = vsel %vm371, %v419, 0.0
    %442 = vadd.xlane.f32.xlu0 %v441
    %v443 = vpop.xlane.xlu0 %442
    %v444 = vrcp.pop %v422
    %v445 = vrcp.pop %v425
    %v446 = vrcp.pop %v428
    %v447 = vrcp.pop %v431
    %v448 = vrcp.pop %v434
    %v449 = vrcp.pop %v437
    %v450 = vrcp.pop %v440
    %v451 = vrcp.pop %v443
    %v452 = vmul.f32 %v405, %v444
    %v453 = vmul.f32 %v407, %v445
    %v454 = vmul.f32 %v409, %v446
    %v455 = vmul.f32 %v411, %v447
    %v456 = vmul.f32 %v413, %v448
    %v457 = vmul.f32 %v415, %v449
    %v458 = vmul.f32 %v417, %v450
    %v459 = vmul.f32 %v419, %v451
    %460 = vrot.lane.b32.xlu0 %v184, 64
    %v461 = vpop.permute.xlu0 %460
    %462 = vrot.lane.b32.xlu0 %v189, 64
    %v463 = vpop.permute.xlu0 %462
    %v467 = vsel %vm371, %v452, 0
    %v470 = vsel %vm371, %v453, 0
    %v473 = vsel %vm371, %v454, 0
    %v476 = vsel %vm371, %v455, 0
    %v479 = vsel %vm371, %v456, 0
    %v482 = vsel %vm371, %v457, 0
    %v485 = vsel %vm371, %v458, 0
    %v488 = vsel %vm371, %v459, 0
    %490 = vmatprep.subr.mxu0 0.0
    %491 = vmatpush1.msra.mxu0 0.0
    %492 = vmatprep.subr.mxu0 0.0
    %493 = vmatpush1.msra.mxu0 0.0
    %494 = vmatprep.subr.mxu0 0.0
    %495 = vmatpush1.msra.mxu0 0.0
    %496 = vmatprep.subr.mxu0 0.0
    %497 = vmatpush1.msra.mxu0 0.0
    %498 = vmatprep.subr.mxu0 0.0
    %499 = vmatpush1.msra.mxu0 0.0
    %500 = vmatprep.subr.mxu0 0.0
    %501 = vmatpush1.msra.mxu0 0.0
    %502 = vmatprep.subr.mxu0 0.0
    %503 = vmatpush1.msra.mxu0 0.0
    %504 = vmatprep.subr.mxu0 0.0
    %505 = vmatpush1.msra.mxu0 0.0
    %506 = vmatprep.subr.mxu0 0.0
    %507 = vmatpush1.msra.mxu0 0.0
    %508 = vmatprep.subr.mxu0 0.0
    %509 = vmatpush1.msra.mxu0 0.0
    %510 = vmatprep.subr.mxu0 0.0
    %511 = vmatpush1.msra.mxu0 0.0
    %512 = vmatprep.subr.mxu0 0.0
    %513 = vmatpush1.msra.mxu0 0.0
    %514 = vmatprep.subr.mxu0 0.0
    %515 = vmatpush1.msra.mxu0 0.0
    %516 = vmatprep.subr.mxu0 0.0
    %517 = vmatpush1.msra.mxu0 0.0
    %518 = vmatprep.subr.mxu0 0.0
    %519 = vmatpush1.msra.mxu0 %v463
    %520 = vmatprep.subr.mxu0 0.0
    %521 = vmatpush1.msra.mxu0 %v461
    %522 = vmatprep.subr.mxu0 0.0
    %523 = vmatpush2.msra.mxu0 0.0
    %524 = vmatprep.subr.mxu0 0.0
    %525 = vmatpush2.msra.mxu0 0.0
    %526 = vmatprep.subr.mxu0 0.0
    %527 = vmatpush2.msra.mxu0 0.0
    %528 = vmatprep.subr.mxu0 0.0
    %529 = vmatpush2.msra.mxu0 0.0
    %530 = vmatprep.subr.mxu0 0.0
    %531 = vmatpush2.msra.mxu0 0.0
    %532 = vmatprep.subr.mxu0 0.0
    %533 = vmatpush2.msra.mxu0 0.0
    %534 = vmatprep.subr.mxu0 0.0
    %535 = vmatpush2.msra.mxu0 0.0
    %536 = vmatprep.subr.mxu0 0.0
    %537 = vmatpush2.msra.mxu0 0.0
    %538 = vmatprep.subr.mxu0 0.0
    %539 = vmatpush2.msra.mxu0 0.0
    %540 = vmatprep.subr.mxu0 0.0
    %541 = vmatpush2.msra.mxu0 0.0
    %542 = vmatprep.subr.mxu0 0.0
    %543 = vmatpush2.msra.mxu0 0.0
    %544 = vmatprep.subr.mxu0 0.0
    %545 = vmatpush2.msra.mxu0 0.0
    %546 = vmatprep.subr.mxu0 0.0
    %547 = vmatpush2.msra.mxu0 0.0
    %548 = vmatprep.subr.mxu0 0.0
    %549 = vmatpush2.msra.mxu0 0.0
    %550 = vmatprep.subr.mxu0 0.0
    %551 = vmatpush2.msra.mxu0 0.0
    %552 = vmatprep.subr.mxu0 0.0
    %553 = vmatpush2.msra.mxu0 0.0
    %554 = vmatprep.mubr.f32.mxu0 0.0
    %555 = vmatmul.mubr.f32.gmra.mxu0 %v467
    %v556 = vpop.f32.mrf.mxu0
    %v557 = vadd.f32 0.0, %v556
    %v558 = vpop.f32.mrf.mxu0
    %559 = vmatprep.mubr.f32.mxu0 0.0
    %560 = vmatmul.mubr.f32.gmra.mxu0 %v470
    %v561 = vpop.f32.mrf.mxu0
    %v562 = vadd.f32 0.0, %v561
    %v563 = vpop.f32.mrf.mxu0
    %564 = vmatprep.mubr.f32.mxu0 0.0
    %565 = vmatmul.mubr.f32.gmra.mxu0 %v473
    %v566 = vpop.f32.mrf.mxu0
    %v567 = vadd.f32 0.0, %v566
    %v568 = vpop.f32.mrf.mxu0
    %569 = vmatprep.mubr.f32.mxu0 0.0
    %570 = vmatmul.mubr.f32.gmra.mxu0 %v476
    %v571 = vpop.f32.mrf.mxu0
    %v572 = vadd.f32 0.0, %v571
    %v573 = vpop.f32.mrf.mxu0
    %574 = vmatprep.mubr.f32.mxu0 0.0
    %575 = vmatmul.mubr.f32.gmra.mxu0 %v479
    %v576 = vpop.f32.mrf.mxu0
    %v577 = vadd.f32 0.0, %v576
    %v578 = vpop.f32.mrf.mxu0
    %579 = vmatprep.mubr.f32.mxu0 0.0
    %580 = vmatmul.mubr.f32.gmra.mxu0 %v482
    %v581 = vpop.f32.mrf.mxu0
    %v582 = vadd.f32 0.0, %v581
    %v583 = vpop.f32.mrf.mxu0
    %584 = vmatprep.mubr.f32.mxu0 0.0
    %585 = vmatmul.mubr.f32.gmra.mxu0 %v485
    %v586 = vpop.f32.mrf.mxu0
    %v587 = vadd.f32 0.0, %v586
    %v588 = vpop.f32.mrf.mxu0
    %589 = vmatprep.mubr.f32.mxu0 0.0
    %590 = vmatmul.mubr.f32.gmra.mxu0 %v488
    %v591 = vpop.f32.mrf.mxu0
    %v592 = vadd.f32 0.0, %v591
    %v593 = vpop.f32.mrf.mxu0
    %594 = vdwg.mxu0
    %v595 = vmul.f32 %v557, %v201
    %v596 = vmul.f32 %v562, %v203
    %v597 = vmul.f32 %v567, %v205
    %v598 = vmul.f32 %v572, %v207
    %v599 = vmul.f32 %v577, %v209
    %v600 = vmul.f32 %v582, %v211
    %v601 = vmul.f32 %v587, %v213
    %v602 = vmul.f32 %v592, %v215
    %v603 = vadd.f32 %v595, %v597
    %v604 = vadd.f32 %v596, %v598
    %v605 = vadd.f32 %v603, %v599
    %v606 = vadd.f32 %v604, %v600
    %v607 = vadd.f32 %v605, %v601
    %v608 = vadd.f32 %v606, %v602
    %v609 = vld [vmem:[%s1 + $0x5] sm:$0x1]
    %v610 = vlaneseq
    %v611 = vshrl.u32 %v610, 7
    %v612 = vsub.s32 0, %v611
    %v613 = vrot.slane %v609, %v612
    %618 = vrot.lane.b32.xlu0 %v90, 32
    %v619 = vpop.permute.xlu0 %618
    %620 = vrot.lane.b32.xlu0 %v91, 32
    %v621 = vpop.permute.xlu0 %620
    %622 = vrot.lane.b32.xlu0 %v92, 32
    %v623 = vpop.permute.xlu0 %622
    %624 = vrot.lane.b32.xlu0 %v93, 32
    %v625 = vpop.permute.xlu0 %624
    %v631 = vsel %vm46, %v607, 0
    %v634 = vsel %vm46, %v608, 0
    %636 = vmatprep.subr.mxu0 0.0
    %637 = vmatpush1.msra.mxu0 0.0
    %638 = vmatprep.subr.mxu0 0.0
    %639 = vmatpush1.msra.mxu0 0.0
    %640 = vmatprep.subr.mxu0 0.0
    %641 = vmatpush1.msra.mxu0 0.0
    %642 = vmatprep.subr.mxu0 0.0
    %643 = vmatpush1.msra.mxu0 0.0
    %644 = vmatprep.subr.mxu0 0.0
    %645 = vmatpush1.msra.mxu0 0.0
    %646 = vmatprep.subr.mxu0 0.0
    %647 = vmatpush1.msra.mxu0 0.0
    %648 = vmatprep.subr.mxu0 0.0
    %649 = vmatpush1.msra.mxu0 0.0
    %650 = vmatprep.subr.mxu0 0.0
    %651 = vmatpush1.msra.mxu0 0.0
    %652 = vmatprep.subr.mxu0 0.0
    %653 = vmatpush1.msra.mxu0 0.0
    %654 = vmatprep.subr.mxu0 0.0
    %655 = vmatpush1.msra.mxu0 0.0
    %656 = vmatprep.subr.mxu0 0.0
    %657 = vmatpush1.msra.mxu0 0.0
    %658 = vmatprep.subr.mxu0 0.0
    %659 = vmatpush1.msra.mxu0 0.0
    %660 = vmatprep.subr.mxu0 0.0
    %661 = vmatpush1.msra.mxu0 %v625
    %662 = vmatprep.subr.mxu0 0.0
    %663 = vmatpush1.msra.mxu0 %v623
    %664 = vmatprep.subr.mxu0 0.0
    %665 = vmatpush1.msra.mxu0 %v621
    %666 = vmatprep.subr.mxu0 0.0
    %667 = vmatpush1.msra.mxu0 %v619
    %668 = vmatprep.subr.mxu0 0.0
    %669 = vmatpush2.msra.mxu0 0.0
    %670 = vmatprep.subr.mxu0 0.0
    %671 = vmatpush2.msra.mxu0 0.0
    %672 = vmatprep.subr.mxu0 0.0
    %673 = vmatpush2.msra.mxu0 0.0
    %674 = vmatprep.subr.mxu0 0.0
    %675 = vmatpush2.msra.mxu0 0.0
    %676 = vmatprep.subr.mxu0 0.0
    %677 = vmatpush2.msra.mxu0 0.0
    %678 = vmatprep.subr.mxu0 0.0
    %679 = vmatpush2.msra.mxu0 0.0
    %680 = vmatprep.subr.mxu0 0.0
    %681 = vmatpush2.msra.mxu0 0.0
    %682 = vmatprep.subr.mxu0 0.0
    %683 = vmatpush2.msra.mxu0 0.0
    %684 = vmatprep.subr.mxu0 0.0
    %685 = vmatpush2.msra.mxu0 0.0
    %686 = vmatprep.subr.mxu0 0.0
    %687 = vmatpush2.msra.mxu0 0.0
    %688 = vmatprep.subr.mxu0 0.0
    %689 = vmatpush2.msra.mxu0 0.0
    %690 = vmatprep.subr.mxu0 0.0
    %691 = vmatpush2.msra.mxu0 0.0
    %692 = vmatprep.subr.mxu0 0.0
    %693 = vmatpush2.msra.mxu0 0.0
    %694 = vmatprep.subr.mxu0 0.0
    %695 = vmatpush2.msra.mxu0 0.0
    %696 = vmatprep.subr.mxu0 0.0
    %697 = vmatpush2.msra.mxu0 0.0
    %698 = vmatprep.subr.mxu0 0.0
    %699 = vmatpush2.msra.mxu0 0.0
    %700 = vmatprep.mubr.f32.mxu0 0.0
    %701 = vmatmul.mubr.f32.gmra.mxu0 %v631
    %v702 = vpop.f32.mrf.mxu0
    %v703 = vadd.f32 %v613, %v702
    %v704 = vpop.f32.mrf.mxu0
    %705 = vmatprep.mubr.f32.mxu0 0.0
    %706 = vmatmul.mubr.f32.gmra.mxu0 %v634
    %v707 = vpop.f32.mrf.mxu0
    %v708 = vadd.f32 %v613, %v707
    %v709 = vpop.f32.mrf.mxu0
    %710 = vdwg.mxu0
    %v711 = vadd.f32 %v88, %v703
    %v712 = vadd.f32 %v89, %v708
    %v713 = vld [vmem:[%s1 + $0x6] sm:$0x1]
    %v714 = vld [vmem:[%s1 + $0x7] sm:$0x1]
    %v715 = vsel %vm46, %v711, 0.0
    %716 = vadd.xlane.f32.xlu0 %v715
    %v717 = vpop.xlane.xlu0 %716
    %v718 = vsel %vm46, %v712, 0.0
    %719 = vadd.xlane.f32.xlu0 %v718
    %v720 = vpop.xlane.xlu0 %719
    %v721 = vmul.f32 %v717, %v53
    %v722 = vmul.f32 %v720, %v53
    %v723 = vmul.f32 %v711, %v711
    %v724 = vmul.f32 %v712, %v712
    %v725 = vsel %vm46, %v723, 0.0
    %726 = vadd.xlane.f32.xlu0 %v725
    %v727 = vpop.xlane.xlu0 %726
    %v728 = vsel %vm46, %v724, 0.0
    %729 = vadd.xlane.f32.xlu0 %v728
    %v730 = vpop.xlane.xlu0 %729
    %v731 = vmul.f32 %v727, %v53
    %v732 = vmul.f32 %v730, %v53
    %v733 = vmul.f32 %v721, %v721
    %v734 = vmul.f32 %v722, %v722
    %v735 = vsub.f32 %v731, %v733
    %v736 = vsub.f32 %v732, %v734
    %v737 = vsub.f32 %v711, %v721
    %v738 = vsub.f32 %v712, %v722
    %v739 = vadd.f32 %v735, 1e-12
    %v740 = vadd.f32 %v736, 1e-12
    %v741 = vrsqrt.pop %v739
    %v742 = vrsqrt.pop %v740
    %v743 = vmul.f32 %v737, %v741
    %v744 = vmul.f32 %v738, %v742
    %v745 = vlaneseq
    %v746 = vshrl.u32 %v745, 7
    %v747 = vsub.s32 0, %v746
    %v748 = vrot.slane %v713, %v747
    %v749 = vmul.f32 %v743, %v748
    %v750 = vmul.f32 %v744, %v748
    %v751 = vlaneseq
    %v752 = vshrl.u32 %v751, 7
    %v753 = vsub.s32 0, %v752
    %v754 = vrot.slane %v714, %v753
    %v755 = vadd.f32 %v749, %v754
    %v756 = vadd.f32 %v750, %v754
    %v757 = vld [vmem:[%s1 + $0x8] sm:$0x1]
    %v758 = vlaneseq
    %v759 = vshrl.u32 %v758, 7
    %v760 = vsub.s32 0, %v759
    %v761 = vrot.slane %v757, %v760
    %v763 = vsel %vm46, %v755, 0
    %v766 = vsel %vm46, %v756, 0
    %768 = vmatprep.subr.mxu0 0.0
    %769 = vmatpush1.msra.mxu0 0.0
    %770 = vmatprep.subr.mxu0 0.0
    %771 = vmatpush1.msra.mxu0 0.0
    %772 = vmatprep.subr.mxu0 0.0
    %773 = vmatpush1.msra.mxu0 0.0
    %774 = vmatprep.subr.mxu0 0.0
    %775 = vmatpush1.msra.mxu0 0.0
    %776 = vmatprep.subr.mxu0 0.0
    %777 = vmatpush1.msra.mxu0 0.0
    %778 = vmatprep.subr.mxu0 0.0
    %779 = vmatpush1.msra.mxu0 0.0
    %780 = vmatprep.subr.mxu0 0.0
    %781 = vmatpush1.msra.mxu0 0.0
    %782 = vmatprep.subr.mxu0 0.0
    %783 = vmatpush1.msra.mxu0 0.0
    %784 = vmatprep.subr.mxu0 0.0
    %785 = vmatpush1.msra.mxu0 0.0
    %786 = vmatprep.subr.mxu0 0.0
    %787 = vmatpush1.msra.mxu0 0.0
    %788 = vmatprep.subr.mxu0 0.0
    %789 = vmatpush1.msra.mxu0 0.0
    %790 = vmatprep.subr.mxu0 0.0
    %791 = vmatpush1.msra.mxu0 0.0
    %792 = vmatprep.subr.mxu0 0.0
    %793 = vmatpush1.msra.mxu0 %v97
    %794 = vmatprep.subr.mxu0 0.0
    %795 = vmatpush1.msra.mxu0 %v96
    %796 = vmatprep.subr.mxu0 0.0
    %797 = vmatpush1.msra.mxu0 %v95
    %798 = vmatprep.subr.mxu0 0.0
    %799 = vmatpush1.msra.mxu0 %v94
    %800 = vmatprep.subr.mxu0 0.0
    %801 = vmatpush2.msra.mxu0 0.0
    %802 = vmatprep.subr.mxu0 0.0
    %803 = vmatpush2.msra.mxu0 0.0
    %804 = vmatprep.subr.mxu0 0.0
    %805 = vmatpush2.msra.mxu0 0.0
    %806 = vmatprep.subr.mxu0 0.0
    %807 = vmatpush2.msra.mxu0 0.0
    %808 = vmatprep.subr.mxu0 0.0
    %809 = vmatpush2.msra.mxu0 0.0
    %810 = vmatprep.subr.mxu0 0.0
    %811 = vmatpush2.msra.mxu0 0.0
    %812 = vmatprep.subr.mxu0 0.0
    %813 = vmatpush2.msra.mxu0 0.0
    %814 = vmatprep.subr.mxu0 0.0
    %815 = vmatpush2.msra.mxu0 0.0
    %816 = vmatprep.subr.mxu0 0.0
    %817 = vmatpush2.msra.mxu0 0.0
    %818 = vmatprep.subr.mxu0 0.0
    %819 = vmatpush2.msra.mxu0 0.0
    %820 = vmatprep.subr.mxu0 0.0
    %821 = vmatpush2.msra.mxu0 0.0
    %822 = vmatprep.subr.mxu0 0.0
    %823 = vmatpush2.msra.mxu0 0.0
    %824 = vmatprep.subr.mxu0 0.0
    %825 = vmatpush2.msra.mxu0 0.0
    %826 = vmatprep.subr.mxu0 0.0
    %827 = vmatpush2.msra.mxu0 0.0
    %828 = vmatprep.subr.mxu0 0.0
    %829 = vmatpush2.msra.mxu0 0.0
    %830 = vmatprep.subr.mxu0 0.0
    %831 = vmatpush2.msra.mxu0 0.0
    %832 = vmatprep.mubr.f32.mxu0 0.0
    %833 = vmatmul.mubr.f32.gmra.mxu0 %v763
    %v834 = vpop.f32.mrf.mxu0
    %v835 = vadd.f32 %v761, %v834
    %v836 = vpop.f32.mrf.mxu0
    %837 = vmatprep.mubr.f32.mxu0 0.0
    %838 = vmatmul.mubr.f32.gmra.mxu0 %v766
    %v839 = vpop.f32.mrf.mxu0
    %v840 = vadd.f32 %v761, %v839
    %v841 = vpop.f32.mrf.mxu0
    %842 = vdwg.mxu0
    %v843 = vmul.f32 %v835, 0.5
    %v844 = vmul.f32 %v840, 0.5
    %v845 = vmul.f32 %v835, 0.044715
    %v846 = vmul.f32 %v840, 0.044715
    %v847 = vmul.f32 %v845, %v835
    %v848 = vmul.f32 %v846, %v840
    %v849 = vmul.f32 %v847, %v835
    %v850 = vmul.f32 %v848, %v840
    %v851 = vadd.f32 %v835, %v849
    %v852 = vadd.f32 %v840, %v850
    %v853 = vmul.f32 %v851, 0.7978846
    %v854 = vmul.f32 %v852, 0.7978846
    %v855 = vtanh.pop %v853
    %v856 = vtanh.pop %v854
    %v857 = vadd.f32 %v855, 1.0
    %v858 = vadd.f32 %v856, 1.0
    %v859 = vmul.f32 %v843, %v857
    %v860 = vmul.f32 %v844, %v858
    %v861 = vld [vmem:[%s1 + $0x9] sm:$0x1]
    %v862 = vlaneseq
    %v863 = vshrl.u32 %v862, 7
    %v864 = vsub.s32 0, %v863
    %v865 = vrot.slane %v861, %v864
    %vm866 = vcmask 523264
    %v868 = vsel %vm866, %v859, 0
    %v871 = vsel %vm866, %v860, 0
    %873 = vmatprep.subr.mxu0 0.0
    %874 = vmatpush1.msra.mxu0 0.0
    %875 = vmatprep.subr.mxu0 0.0
    %876 = vmatpush1.msra.mxu0 0.0
    %877 = vmatprep.subr.mxu0 0.0
    %878 = vmatpush1.msra.mxu0 0.0
    %879 = vmatprep.subr.mxu0 0.0
    %880 = vmatpush1.msra.mxu0 0.0
    %881 = vmatprep.subr.mxu0 0.0
    %882 = vmatpush1.msra.mxu0 0.0
    %883 = vmatprep.subr.mxu0 0.0
    %884 = vmatpush1.msra.mxu0 0.0
    %885 = vmatprep.subr.mxu0 0.0
    %886 = vmatpush1.msra.mxu0 0.0
    %887 = vmatprep.subr.mxu0 0.0
    %888 = vmatpush1.msra.mxu0 0.0
    %889 = vmatprep.subr.mxu0 0.0
    %890 = vmatpush1.msra.mxu0 %v105
    %891 = vmatprep.subr.mxu0 0.0
    %892 = vmatpush1.msra.mxu0 %v104
    %893 = vmatprep.subr.mxu0 0.0
    %894 = vmatpush1.msra.mxu0 %v103
    %895 = vmatprep.subr.mxu0 0.0
    %896 = vmatpush1.msra.mxu0 %v102
    %897 = vmatprep.subr.mxu0 0.0
    %898 = vmatpush1.msra.mxu0 %v101
    %899 = vmatprep.subr.mxu0 0.0
    %900 = vmatpush1.msra.mxu0 %v100
    %901 = vmatprep.subr.mxu0 0.0
    %902 = vmatpush1.msra.mxu0 %v99
    %903 = vmatprep.subr.mxu0 0.0
    %904 = vmatpush1.msra.mxu0 %v98
    %905 = vmatprep.subr.mxu0 0.0
    %906 = vmatpush2.msra.mxu0 0.0
    %907 = vmatprep.subr.mxu0 0.0
    %908 = vmatpush2.msra.mxu0 0.0
    %909 = vmatprep.subr.mxu0 0.0
    %910 = vmatpush2.msra.mxu0 0.0
    %911 = vmatprep.subr.mxu0 0.0
    %912 = vmatpush2.msra.mxu0 0.0
    %913 = vmatprep.subr.mxu0 0.0
    %914 = vmatpush2.msra.mxu0 0.0
    %915 = vmatprep.subr.mxu0 0.0
    %916 = vmatpush2.msra.mxu0 0.0
    %917 = vmatprep.subr.mxu0 0.0
    %918 = vmatpush2.msra.mxu0 0.0
    %919 = vmatprep.subr.mxu0 0.0
    %920 = vmatpush2.msra.mxu0 0.0
    %921 = vmatprep.subr.mxu0 0.0
    %922 = vmatpush2.msra.mxu0 0.0
    %923 = vmatprep.subr.mxu0 0.0
    %924 = vmatpush2.msra.mxu0 0.0
    %925 = vmatprep.subr.mxu0 0.0
    %926 = vmatpush2.msra.mxu0 0.0
    %927 = vmatprep.subr.mxu0 0.0
    %928 = vmatpush2.msra.mxu0 0.0
    %929 = vmatprep.subr.mxu0 0.0
    %930 = vmatpush2.msra.mxu0 0.0
    %931 = vmatprep.subr.mxu0 0.0
    %932 = vmatpush2.msra.mxu0 0.0
    %933 = vmatprep.subr.mxu0 0.0
    %934 = vmatpush2.msra.mxu0 0.0
    %935 = vmatprep.subr.mxu0 0.0
    %936 = vmatpush2.msra.mxu0 0.0
    %937 = vmatprep.mubr.f32.mxu0 0.0
    %938 = vmatmul.mubr.f32.gmra.mxu0 %v868
    %v939 = vpop.f32.mrf.mxu0
    %v940 = vadd.f32 %v865, %v939
    %v941 = vpop.f32.mrf.mxu0
    %942 = vmatprep.mubr.f32.mxu0 0.0
    %943 = vmatmul.mubr.f32.gmra.mxu0 %v871
    %v944 = vpop.f32.mrf.mxu0
    %v945 = vadd.f32 %v865, %v944
    %v946 = vpop.f32.mrf.mxu0
    %947 = vdwg.mxu0
    %v948 = vadd.f32 %v755, %v940
    %v949 = vadd.f32 %v756, %v945
    %v950 = vld [vmem:[%s1 + $0xa] sm:$0x1]
    %v951 = vld [vmem:[%s1 + $0xb] sm:$0x1]
    %v952 = vsel %vm46, %v948, 0.0
    %953 = vadd.xlane.f32.xlu0 %v952
    %v954 = vpop.xlane.xlu0 %953
    %v955 = vsel %vm46, %v949, 0.0
    %956 = vadd.xlane.f32.xlu0 %v955
    %v957 = vpop.xlane.xlu0 %956
    %v958 = vmul.f32 %v954, %v53
    %v959 = vmul.f32 %v957, %v53
    %v960 = vmul.f32 %v948, %v948
    %v961 = vmul.f32 %v949, %v949
    %v962 = vsel %vm46, %v960, 0.0
    %963 = vadd.xlane.f32.xlu0 %v962
    %v964 = vpop.xlane.xlu0 %963
    %v965 = vsel %vm46, %v961, 0.0
    %966 = vadd.xlane.f32.xlu0 %v965
    %v967 = vpop.xlane.xlu0 %966
    %v968 = vmul.f32 %v964, %v53
    %v969 = vmul.f32 %v967, %v53
    %v970 = vmul.f32 %v958, %v958
    %v971 = vmul.f32 %v959, %v959
    %v972 = vsub.f32 %v968, %v970
    %v973 = vsub.f32 %v969, %v971
    %v974 = vsub.f32 %v948, %v958
    %v975 = vsub.f32 %v949, %v959
    %v976 = vadd.f32 %v972, 1e-12
    %v977 = vadd.f32 %v973, 1e-12
    %v978 = vrsqrt.pop %v976
    %v979 = vrsqrt.pop %v977
    %v980 = vmul.f32 %v974, %v978
    %v981 = vmul.f32 %v975, %v979
    %v982 = vlaneseq
    %v983 = vshrl.u32 %v982, 7
    %v984 = vsub.s32 0, %v983
    %v985 = vrot.slane %v950, %v984
    %v986 = vmul.f32 %v980, %v985
    %v987 = vmul.f32 %v981, %v985
    %v988 = vlaneseq
    %v989 = vshrl.u32 %v988, 7
    %v990 = vsub.s32 0, %v989
    %v991 = vrot.slane %v951, %v990
    %v992 = vadd.f32 %v986, %v991
    %v993 = vadd.f32 %v987, %v991
    %s994 = scalar_lea.vmem %s3, 64
    %v995 = vld [vmem:[%s994] sm:$0xff]
    %v996 = vld [vmem:[%s994 + $0x10] sm:$0xff]
    %v997 = vld [vmem:[%s994 + $0x20] sm:$0xff]
    %v998 = vld [vmem:[%s994 + $0x30] sm:$0xff]
    %v999 = vld [vmem:[%s994 + $0x8] sm:$0xff]
    %v1000 = vld [vmem:[%s994 + $0x18] sm:$0xff]
    %v1001 = vld [vmem:[%s994 + $0x28] sm:$0xff]
    %v1002 = vld [vmem:[%s994 + $0x38] sm:$0xff]
    %s1003 = scalar_lea.vmem %s4, 64
    %v1004 = vld [vmem:[%s1003] sm:$0xff]
    %v1005 = vld [vmem:[%s1003 + $0x8] sm:$0xff]
    %v1006 = vld [vmem:[%s1003 + $0x10] sm:$0xff]
    %v1007 = vld [vmem:[%s1003 + $0x18] sm:$0xff]
    %v1008 = vld [vmem:[%s1003 + $0x20] sm:$0xff]
    %v1009 = vld [vmem:[%s1003 + $0x28] sm:$0xff]
    %v1010 = vld [vmem:[%s1003 + $0x30] sm:$0xff]
    %v1011 = vld [vmem:[%s1003 + $0x38] sm:$0xff]
    %v1012 = vld [vmem:[%s1 + $0xc] sm:$0x1]
    %v1013 = vlaneseq
    %v1014 = vshrl.u32 %v1013, 7
    %v1015 = vsub.s32 0, %v1014
    %v1016 = vrot.slane %v1012, %v1015
    %v1018 = vsel %vm46, %v992, 0
    %v1021 = vsel %vm46, %v993, 0
    %1023 = vmatprep.subr.mxu0 0.0
    %1024 = vmatpush1.msra.mxu0 0.0
    %1025 = vmatprep.subr.mxu0 0.0
    %1026 = vmatpush1.msra.mxu0 0.0
    %1027 = vmatprep.subr.mxu0 0.0
    %1028 = vmatpush1.msra.mxu0 0.0
    %1029 = vmatprep.subr.mxu0 0.0
    %1030 = vmatpush1.msra.mxu0 0.0
    %1031 = vmatprep.subr.mxu0 0.0
    %1032 = vmatpush1.msra.mxu0 0.0
    %1033 = vmatprep.subr.mxu0 0.0
    %1034 = vmatpush1.msra.mxu0 0.0
    %1035 = vmatprep.subr.mxu0 0.0
    %1036 = vmatpush1.msra.mxu0 0.0
    %1037 = vmatprep.subr.mxu0 0.0
    %1038 = vmatpush1.msra.mxu0 0.0
    %1039 = vmatprep.subr.mxu0 0.0
    %1040 = vmatpush1.msra.mxu0 0.0
    %1041 = vmatprep.subr.mxu0 0.0
    %1042 = vmatpush1.msra.mxu0 0.0
    %1043 = vmatprep.subr.mxu0 0.0
    %1044 = vmatpush1.msra.mxu0 0.0
    %1045 = vmatprep.subr.mxu0 0.0
    %1046 = vmatpush1.msra.mxu0 0.0
    %1047 = vmatprep.subr.mxu0 0.0
    %1048 = vmatpush1.msra.mxu0 %v998
    %1049 = vmatprep.subr.mxu0 0.0
    %1050 = vmatpush1.msra.mxu0 %v997
    %1051 = vmatprep.subr.mxu0 0.0
    %1052 = vmatpush1.msra.mxu0 %v996
    %1053 = vmatprep.subr.mxu0 0.0
    %1054 = vmatpush1.msra.mxu0 %v995
    %1055 = vmatprep.subr.mxu0 0.0
    %1056 = vmatpush2.msra.mxu0 0.0
    %1057 = vmatprep.subr.mxu0 0.0
    %1058 = vmatpush2.msra.mxu0 0.0
    %1059 = vmatprep.subr.mxu0 0.0
    %1060 = vmatpush2.msra.mxu0 0.0
    %1061 = vmatprep.subr.mxu0 0.0
    %1062 = vmatpush2.msra.mxu0 0.0
    %1063 = vmatprep.subr.mxu0 0.0
    %1064 = vmatpush2.msra.mxu0 0.0
    %1065 = vmatprep.subr.mxu0 0.0
    %1066 = vmatpush2.msra.mxu0 0.0
    %1067 = vmatprep.subr.mxu0 0.0
    %1068 = vmatpush2.msra.mxu0 0.0
    %1069 = vmatprep.subr.mxu0 0.0
    %1070 = vmatpush2.msra.mxu0 0.0
    %1071 = vmatprep.subr.mxu0 0.0
    %1072 = vmatpush2.msra.mxu0 0.0
    %1073 = vmatprep.subr.mxu0 0.0
    %1074 = vmatpush2.msra.mxu0 0.0
    %1075 = vmatprep.subr.mxu0 0.0
    %1076 = vmatpush2.msra.mxu0 0.0
    %1077 = vmatprep.subr.mxu0 0.0
    %1078 = vmatpush2.msra.mxu0 0.0
    %1079 = vmatprep.subr.mxu0 0.0
    %1080 = vmatpush2.msra.mxu0 0.0
    %1081 = vmatprep.subr.mxu0 0.0
    %1082 = vmatpush2.msra.mxu0 0.0
    %1083 = vmatprep.subr.mxu0 0.0
    %1084 = vmatpush2.msra.mxu0 0.0
    %1085 = vmatprep.subr.mxu0 0.0
    %1086 = vmatpush2.msra.mxu0 0.0
    %1087 = vmatprep.mubr.f32.mxu0 0.0
    %1088 = vmatmul.mubr.f32.gmra.mxu0 %v1018
    %v1089 = vpop.f32.mrf.mxu0
    %v1090 = vadd.f32 %v1016, %v1089
    %v1091 = vpop.f32.mrf.mxu0
    %1092 = vmatprep.mubr.f32.mxu0 0.0
    %1093 = vmatmul.mubr.f32.gmra.mxu0 %v1021
    %v1094 = vpop.f32.mrf.mxu0
    %v1095 = vadd.f32 %v1016, %v1094
    %v1096 = vpop.f32.mrf.mxu0
    %1097 = vdwg.mxu0
    %v1098 = vmul.f32 %v1090, %v201
    %v1099 = vmul.f32 %v1095, %v203
    %v1100 = vmul.f32 %v1090, %v205
    %v1101 = vmul.f32 %v1095, %v207
    %v1102 = vmul.f32 %v1090, %v209
    %v1103 = vmul.f32 %v1095, %v211
    %v1104 = vmul.f32 %v1090, %v213
    %v1105 = vmul.f32 %v1095, %v215
    %1108 = vrot.lane.b32.xlu0 %v1090, 96
    %v1109 = vpop.permute.xlu0 %1108
    %1110 = vrot.lane.b32.xlu0 %v1095, 96
    %v1111 = vpop.permute.xlu0 %1110
    %v1113 = vsel %vm46, %v1098, 0
    %v1116 = vsel %vm46, %v1099, 0
    %v1119 = vsel %vm46, %v1100, 0
    %v1122 = vsel %vm46, %v1101, 0
    %v1125 = vsel %vm46, %v1102, 0
    %v1128 = vsel %vm46, %v1103, 0
    %v1131 = vsel %vm46, %v1104, 0
    %v1134 = vsel %vm46, %v1105, 0
    %v1136 = vsel %vm46, %v1109, 0
    %v1138 = vsel %vm46, %v1111, 0
    %1140 = vmatprep.subr.mxu0 0.0
    %1141 = vmatpush1.xpose.msra.mxu0 0.0
    %1142 = vmatprep.subr.mxu0 0.0
    %1143 = vmatpush1.xpose.msra.mxu0 0.0
    %1144 = vmatprep.subr.mxu0 0.0
    %1145 = vmatpush1.xpose.msra.mxu0 0.0
    %1146 = vmatprep.subr.mxu0 0.0
    %1147 = vmatpush1.xpose.msra.mxu0 0.0
    %1148 = vmatprep.subr.mxu0 0.0
    %1149 = vmatpush1.xpose.msra.mxu0 0.0
    %1150 = vmatprep.subr.mxu0 0.0
    %1151 = vmatpush1.xpose.msra.mxu0 0.0
    %1152 = vmatprep.subr.mxu0 0.0
    %1153 = vmatpush1.xpose.msra.mxu0 0.0
    %1154 = vmatprep.subr.mxu0 0.0
    %1155 = vmatpush1.xpose.msra.mxu0 0.0
    %1156 = vmatprep.subr.mxu0 0.0
    %1157 = vmatpush1.xpose.msra.mxu0 0.0
    %1158 = vmatprep.subr.mxu0 0.0
    %1159 = vmatpush1.xpose.msra.mxu0 0.0
    %1160 = vmatprep.subr.mxu0 0.0
    %1161 = vmatpush1.xpose.msra.mxu0 0.0
    %1162 = vmatprep.subr.mxu0 0.0
    %1163 = vmatpush1.xpose.msra.mxu0 0.0
    %1164 = vmatprep.subr.mxu0 0.0
    %1165 = vmatpush1.xpose.msra.mxu0 0.0
    %1166 = vmatprep.subr.mxu0 0.0
    %1167 = vmatpush1.xpose.msra.mxu0 0.0
    %1168 = vmatprep.subr.mxu0 0.0
    %1169 = vmatpush1.xpose.msra.mxu0 %v1138
    %1170 = vmatprep.subr.mxu0 0.0
    %1171 = vmatpush1.xpose.msra.mxu0 %v1136
    %1172 = vmatprep.subr.mxu0 0.0
    %1173 = vmatpush2.xpose.msra.mxu0 0.0
    %1174 = vmatprep.subr.mxu0 0.0
    %1175 = vmatpush2.xpose.msra.mxu0 0.0
    %1176 = vmatprep.subr.mxu0 0.0
    %1177 = vmatpush2.xpose.msra.mxu0 0.0
    %1178 = vmatprep.subr.mxu0 0.0
    %1179 = vmatpush2.xpose.msra.mxu0 0.0
    %1180 = vmatprep.subr.mxu0 0.0
    %1181 = vmatpush2.xpose.msra.mxu0 0.0
    %1182 = vmatprep.subr.mxu0 0.0
    %1183 = vmatpush2.xpose.msra.mxu0 0.0
    %1184 = vmatprep.subr.mxu0 0.0
    %1185 = vmatpush2.xpose.msra.mxu0 0.0
    %1186 = vmatprep.subr.mxu0 0.0
    %1187 = vmatpush2.xpose.msra.mxu0 0.0
    %1188 = vmatprep.subr.mxu0 0.0
    %1189 = vmatpush2.xpose.msra.mxu0 0.0
    %1190 = vmatprep.subr.mxu0 0.0
    %1191 = vmatpush2.xpose.msra.mxu0 0.0
    %1192 = vmatprep.subr.mxu0 0.0
    %1193 = vmatpush2.xpose.msra.mxu0 0.0
    %1194 = vmatprep.subr.mxu0 0.0
    %1195 = vmatpush2.xpose.msra.mxu0 0.0
    %1196 = vmatprep.subr.mxu0 0.0
    %1197 = vmatpush2.xpose.msra.mxu0 0.0
    %1198 = vmatprep.subr.mxu0 0.0
    %1199 = vmatpush2.xpose.msra.mxu0 0.0
    %1200 = vmatprep.subr.mxu0 0.0
    %1201 = vmatpush2.xpose.msra.mxu0 0.0
    %1202 = vmatprep.subr.mxu0 0.0
    %1203 = vmatpush2.xpose.msra.mxu0 0.0
    %1204 = vmatprep.mubr.f32.mxu0 0.0
    %1205 = vmatmul.mubr.f32.gmra.mxu0 %v1113
    %v1206 = vpop.f32.mrf.mxu0
    %v1207 = vadd.f32 %v34, %v1206
    %v1208 = vpop.f32.mrf.mxu0
    %1209 = vmatprep.mubr.f32.mxu0 0.0
    %1210 = vmatmul.mubr.f32.gmra.mxu0 %v1116
    %v1211 = vpop.f32.mrf.mxu0
    %v1212 = vadd.f32 %v35, %v1211
    %v1213 = vpop.f32.mrf.mxu0
    %1214 = vmatprep.mubr.f32.mxu0 0.0
    %1215 = vmatmul.mubr.f32.gmra.mxu0 %v1119
    %v1216 = vpop.f32.mrf.mxu0
    %v1217 = vadd.f32 %v36, %v1216
    %v1218 = vpop.f32.mrf.mxu0
    %1219 = vmatprep.mubr.f32.mxu0 0.0
    %1220 = vmatmul.mubr.f32.gmra.mxu0 %v1122
    %v1221 = vpop.f32.mrf.mxu0
    %v1222 = vadd.f32 %v37, %v1221
    %v1223 = vpop.f32.mrf.mxu0
    %1224 = vmatprep.mubr.f32.mxu0 0.0
    %1225 = vmatmul.mubr.f32.gmra.mxu0 %v1125
    %v1226 = vpop.f32.mrf.mxu0
    %v1227 = vadd.f32 %v38, %v1226
    %v1228 = vpop.f32.mrf.mxu0
    %1229 = vmatprep.mubr.f32.mxu0 0.0
    %1230 = vmatmul.mubr.f32.gmra.mxu0 %v1128
    %v1231 = vpop.f32.mrf.mxu0
    %v1232 = vadd.f32 %v39, %v1231
    %v1233 = vpop.f32.mrf.mxu0
    %1234 = vmatprep.mubr.f32.mxu0 0.0
    %1235 = vmatmul.mubr.f32.gmra.mxu0 %v1131
    %v1236 = vpop.f32.mrf.mxu0
    %v1237 = vadd.f32 %v40, %v1236
    %v1238 = vpop.f32.mrf.mxu0
    %1239 = vmatprep.mubr.f32.mxu0 0.0
    %1240 = vmatmul.mubr.f32.gmra.mxu0 %v1134
    %v1241 = vpop.f32.mrf.mxu0
    %v1242 = vadd.f32 %v41, %v1241
    %v1243 = vpop.f32.mrf.mxu0
    %1244 = vdwg.mxu0
    %v1245 = vsel %vm371, %v1207, -inf
    %1246 = vmax.xlane.f32.xlu0 %v1245
    %v1247 = vpop.xlane.xlu0 %1246
    %v1248 = vsel %vm371, %v1212, -inf
    %1249 = vmax.xlane.f32.xlu0 %v1248
    %v1250 = vpop.xlane.xlu0 %1249
    %v1251 = vsel %vm371, %v1217, -inf
    %1252 = vmax.xlane.f32.xlu0 %v1251
    %v1253 = vpop.xlane.xlu0 %1252
    %v1254 = vsel %vm371, %v1222, -inf
    %1255 = vmax.xlane.f32.xlu0 %v1254
    %v1256 = vpop.xlane.xlu0 %1255
    %v1257 = vsel %vm371, %v1227, -inf
    %1258 = vmax.xlane.f32.xlu0 %v1257
    %v1259 = vpop.xlane.xlu0 %1258
    %v1260 = vsel %vm371, %v1232, -inf
    %1261 = vmax.xlane.f32.xlu0 %v1260
    %v1262 = vpop.xlane.xlu0 %1261
    %v1263 = vsel %vm371, %v1237, -inf
    %1264 = vmax.xlane.f32.xlu0 %v1263
    %v1265 = vpop.xlane.xlu0 %1264
    %v1266 = vsel %vm371, %v1242, -inf
    %1267 = vmax.xlane.f32.xlu0 %v1266
    %v1268 = vpop.xlane.xlu0 %1267
    %v1269 = vsub.f32 %v1207, %v1247
    %v1270 = vsub.f32 %v1212, %v1250
    %v1271 = vsub.f32 %v1217, %v1253
    %v1272 = vsub.f32 %v1222, %v1256
    %v1273 = vsub.f32 %v1227, %v1259
    %v1274 = vsub.f32 %v1232, %v1262
    %v1275 = vsub.f32 %v1237, %v1265
    %v1276 = vsub.f32 %v1242, %v1268
    %v1277 = vmul.f32 %v1269, 1.442695
    %v1278 = vpow.pop %v1277
    %v1279 = vmul.f32 %v1270, 1.442695
    %v1280 = vpow.pop %v1279
    %v1281 = vmul.f32 %v1271, 1.442695
    %v1282 = vpow.pop %v1281
    %v1283 = vmul.f32 %v1272, 1.442695
    %v1284 = vpow.pop %v1283
    %v1285 = vmul.f32 %v1273, 1.442695
    %v1286 = vpow.pop %v1285
    %v1287 = vmul.f32 %v1274, 1.442695
    %v1288 = vpow.pop %v1287
    %v1289 = vmul.f32 %v1275, 1.442695
    %v1290 = vpow.pop %v1289
    %v1291 = vmul.f32 %v1276, 1.442695
    %v1292 = vpow.pop %v1291
    %v1293 = vsel %vm371, %v1278, 0.0
    %1294 = vadd.xlane.f32.xlu0 %v1293
    %v1295 = vpop.xlane.xlu0 %1294
    %v1296 = vsel %vm371, %v1280, 0.0
    %1297 = vadd.xlane.f32.xlu0 %v1296
    %v1298 = vpop.xlane.xlu0 %1297
    %v1299 = vsel %vm371, %v1282, 0.0
    %1300 = vadd.xlane.f32.xlu0 %v1299
    %v1301 = vpop.xlane.xlu0 %1300
    %v1302 = vsel %vm371, %v1284, 0.0
    %1303 = vadd.xlane.f32.xlu0 %v1302
    %v1304 = vpop.xlane.xlu0 %1303
    %v1305 = vsel %vm371, %v1286, 0.0
    %1306 = vadd.xlane.f32.xlu0 %v1305
    %v1307 = vpop.xlane.xlu0 %1306
    %v1308 = vsel %vm371, %v1288, 0.0
    %1309 = vadd.xlane.f32.xlu0 %v1308
    %v1310 = vpop.xlane.xlu0 %1309
    %v1311 = vsel %vm371, %v1290, 0.0
    %1312 = vadd.xlane.f32.xlu0 %v1311
    %v1313 = vpop.xlane.xlu0 %1312
    %v1314 = vsel %vm371, %v1292, 0.0
    %1315 = vadd.xlane.f32.xlu0 %v1314
    %v1316 = vpop.xlane.xlu0 %1315
    %v1317 = vrcp.pop %v1295
    %v1318 = vrcp.pop %v1298
    %v1319 = vrcp.pop %v1301
    %v1320 = vrcp.pop %v1304
    %v1321 = vrcp.pop %v1307
    %v1322 = vrcp.pop %v1310
    %v1323 = vrcp.pop %v1313
    %v1324 = vrcp.pop %v1316
    %v1325 = vmul.f32 %v1278, %v1317
    %v1326 = vmul.f32 %v1280, %v1318
    %v1327 = vmul.f32 %v1282, %v1319
    %v1328 = vmul.f32 %v1284, %v1320
    %v1329 = vmul.f32 %v1286, %v1321
    %v1330 = vmul.f32 %v1288, %v1322
    %v1331 = vmul.f32 %v1290, %v1323
    %v1332 = vmul.f32 %v1292, %v1324
    %1333 = vrot.lane.b32.xlu0 %v1090, 64
    %v1334 = vpop.permute.xlu0 %1333
    %1335 = vrot.lane.b32.xlu0 %v1095, 64
    %v1336 = vpop.permute.xlu0 %1335
    %v1340 = vsel %vm371, %v1325, 0
    %v1343 = vsel %vm371, %v1326, 0
    %v1346 = vsel %vm371, %v1327, 0
    %v1349 = vsel %vm371, %v1328, 0
    %v1352 = vsel %vm371, %v1329, 0
    %v1355 = vsel %vm371, %v1330, 0
    %v1358 = vsel %vm371, %v1331, 0
    %v1361 = vsel %vm371, %v1332, 0
    %1363 = vmatprep.subr.mxu0 0.0
    %1364 = vmatpush1.msra.mxu0 0.0
    %1365 = vmatprep.subr.mxu0 0.0
    %1366 = vmatpush1.msra.mxu0 0.0
    %1367 = vmatprep.subr.mxu0 0.0
    %1368 = vmatpush1.msra.mxu0 0.0
    %1369 = vmatprep.subr.mxu0 0.0
    %1370 = vmatpush1.msra.mxu0 0.0
    %1371 = vmatprep.subr.mxu0 0.0
    %1372 = vmatpush1.msra.mxu0 0.0
    %1373 = vmatprep.subr.mxu0 0.0
    %1374 = vmatpush1.msra.mxu0 0.0
    %1375 = vmatprep.subr.mxu0 0.0
    %1376 = vmatpush1.msra.mxu0 0.0
    %1377 = vmatprep.subr.mxu0 0.0
    %1378 = vmatpush1.msra.mxu0 0.0
    %1379 = vmatprep.subr.mxu0 0.0
    %1380 = vmatpush1.msra.mxu0 0.0
    %1381 = vmatprep.subr.mxu0 0.0
    %1382 = vmatpush1.msra.mxu0 0.0
    %1383 = vmatprep.subr.mxu0 0.0
    %1384 = vmatpush1.msra.mxu0 0.0
    %1385 = vmatprep.subr.mxu0 0.0
    %1386 = vmatpush1.msra.mxu0 0.0
    %1387 = vmatprep.subr.mxu0 0.0
    %1388 = vmatpush1.msra.mxu0 0.0
    %1389 = vmatprep.subr.mxu0 0.0
    %1390 = vmatpush1.msra.mxu0 0.0
    %1391 = vmatprep.subr.mxu0 0.0
    %1392 = vmatpush1.msra.mxu0 %v1336
    %1393 = vmatprep.subr.mxu0 0.0
    %1394 = vmatpush1.msra.mxu0 %v1334
    %1395 = vmatprep.subr.mxu0 0.0
    %1396 = vmatpush2.msra.mxu0 0.0
    %1397 = vmatprep.subr.mxu0 0.0
    %1398 = vmatpush2.msra.mxu0 0.0
    %1399 = vmatprep.subr.mxu0 0.0
    %1400 = vmatpush2.msra.mxu0 0.0
    %1401 = vmatprep.subr.mxu0 0.0
    %1402 = vmatpush2.msra.mxu0 0.0
    %1403 = vmatprep.subr.mxu0 0.0
    %1404 = vmatpush2.msra.mxu0 0.0
    %1405 = vmatprep.subr.mxu0 0.0
    %1406 = vmatpush2.msra.mxu0 0.0
    %1407 = vmatprep.subr.mxu0 0.0
    %1408 = vmatpush2.msra.mxu0 0.0
    %1409 = vmatprep.subr.mxu0 0.0
    %1410 = vmatpush2.msra.mxu0 0.0
    %1411 = vmatprep.subr.mxu0 0.0
    %1412 = vmatpush2.msra.mxu0 0.0
    %1413 = vmatprep.subr.mxu0 0.0
    %1414 = vmatpush2.msra.mxu0 0.0
    %1415 = vmatprep.subr.mxu0 0.0
    %1416 = vmatpush2.msra.mxu0 0.0
    %1417 = vmatprep.subr.mxu0 0.0
    %1418 = vmatpush2.msra.mxu0 0.0
    %1419 = vmatprep.subr.mxu0 0.0
    %1420 = vmatpush2.msra.mxu0 0.0
    %1421 = vmatprep.subr.mxu0 0.0
    %1422 = vmatpush2.msra.mxu0 0.0
    %1423 = vmatprep.subr.mxu0 0.0
    %1424 = vmatpush2.msra.mxu0 0.0
    %1425 = vmatprep.subr.mxu0 0.0
    %1426 = vmatpush2.msra.mxu0 0.0
    %1427 = vmatprep.mubr.f32.mxu0 0.0
    %1428 = vmatmul.mubr.f32.gmra.mxu0 %v1340
    %v1429 = vpop.f32.mrf.mxu0
    %v1430 = vadd.f32 0.0, %v1429
    %v1431 = vpop.f32.mrf.mxu0
    %1432 = vmatprep.mubr.f32.mxu0 0.0
    %1433 = vmatmul.mubr.f32.gmra.mxu0 %v1343
    %v1434 = vpop.f32.mrf.mxu0
    %v1435 = vadd.f32 0.0, %v1434
    %v1436 = vpop.f32.mrf.mxu0
    %1437 = vmatprep.mubr.f32.mxu0 0.0
    %1438 = vmatmul.mubr.f32.gmra.mxu0 %v1346
    %v1439 = vpop.f32.mrf.mxu0
    %v1440 = vadd.f32 0.0, %v1439
    %v1441 = vpop.f32.mrf.mxu0
    %1442 = vmatprep.mubr.f32.mxu0 0.0
    %1443 = vmatmul.mubr.f32.gmra.mxu0 %v1349
    %v1444 = vpop.f32.mrf.mxu0
    %v1445 = vadd.f32 0.0, %v1444
    %v1446 = vpop.f32.mrf.mxu0
    %1447 = vmatprep.mubr.f32.mxu0 0.0
    %1448 = vmatmul.mubr.f32.gmra.mxu0 %v1352
    %v1449 = vpop.f32.mrf.mxu0
    %v1450 = vadd.f32 0.0, %v1449
    %v1451 = vpop.f32.mrf.mxu0
    %1452 = vmatprep.mubr.f32.mxu0 0.0
    %1453 = vmatmul.mubr.f32.gmra.mxu0 %v1355
    %v1454 = vpop.f32.mrf.mxu0
    %v1455 = vadd.f32 0.0, %v1454
    %v1456 = vpop.f32.mrf.mxu0
    %1457 = vmatprep.mubr.f32.mxu0 0.0
    %1458 = vmatmul.mubr.f32.gmra.mxu0 %v1358
    %v1459 = vpop.f32.mrf.mxu0
    %v1460 = vadd.f32 0.0, %v1459
    %v1461 = vpop.f32.mrf.mxu0
    %1462 = vmatprep.mubr.f32.mxu0 0.0
    %1463 = vmatmul.mubr.f32.gmra.mxu0 %v1361
    %v1464 = vpop.f32.mrf.mxu0
    %v1465 = vadd.f32 0.0, %v1464
    %v1466 = vpop.f32.mrf.mxu0
    %1467 = vdwg.mxu0
    %v1468 = vmul.f32 %v1430, %v201
    %v1469 = vmul.f32 %v1435, %v203
    %v1470 = vmul.f32 %v1440, %v205
    %v1471 = vmul.f32 %v1445, %v207
    %v1472 = vmul.f32 %v1450, %v209
    %v1473 = vmul.f32 %v1455, %v211
    %v1474 = vmul.f32 %v1460, %v213
    %v1475 = vmul.f32 %v1465, %v215
    %v1476 = vadd.f32 %v1468, %v1470
    %v1477 = vadd.f32 %v1469, %v1471
    %v1478 = vadd.f32 %v1476, %v1472
    %v1479 = vadd.f32 %v1477, %v1473
    %v1480 = vadd.f32 %v1478, %v1474
    %v1481 = vadd.f32 %v1479, %v1475
    %v1482 = vld [vmem:[%s1 + $0xd] sm:$0x1]
    %v1483 = vlaneseq
    %v1484 = vshrl.u32 %v1483, 7
    %v1485 = vsub.s32 0, %v1484
    %v1486 = vrot.slane %v1482, %v1485
    %1491 = vrot.lane.b32.xlu0 %v995, 32
    %v1492 = vpop.permute.xlu0 %1491
    %1493 = vrot.lane.b32.xlu0 %v996, 32
    %v1494 = vpop.permute.xlu0 %1493
    %1495 = vrot.lane.b32.xlu0 %v997, 32
    %v1496 = vpop.permute.xlu0 %1495
    %1497 = vrot.lane.b32.xlu0 %v998, 32
    %v1498 = vpop.permute.xlu0 %1497
    %v1504 = vsel %vm46, %v1480, 0
    %v1507 = vsel %vm46, %v1481, 0
    %1509 = vmatprep.subr.mxu0 0.0
    %1510 = vmatpush1.msra.mxu0 0.0
    %1511 = vmatprep.subr.mxu0 0.0
    %1512 = vmatpush1.msra.mxu0 0.0
    %1513 = vmatprep.subr.mxu0 0.0
    %1514 = vmatpush1.msra.mxu0 0.0
    %1515 = vmatprep.subr.mxu0 0.0
    %1516 = vmatpush1.msra.mxu0 0.0
    %1517 = vmatprep.subr.mxu0 0.0
    %1518 = vmatpush1.msra.mxu0 0.0
    %1519 = vmatprep.subr.mxu0 0.0
    %1520 = vmatpush1.msra.mxu0 0.0
    %1521 = vmatprep.subr.mxu0 0.0
    %1522 = vmatpush1.msra.mxu0 0.0
    %1523 = vmatprep.subr.mxu0 0.0
    %1524 = vmatpush1.msra.mxu0 0.0
    %1525 = vmatprep.subr.mxu0 0.0
    %1526 = vmatpush1.msra.mxu0 0.0
    %1527 = vmatprep.subr.mxu0 0.0
    %1528 = vmatpush1.msra.mxu0 0.0
    %1529 = vmatprep.subr.mxu0 0.0
    %1530 = vmatpush1.msra.mxu0 0.0
    %1531 = vmatprep.subr.mxu0 0.0
    %1532 = vmatpush1.msra.mxu0 0.0
    %1533 = vmatprep.subr.mxu0 0.0
    %1534 = vmatpush1.msra.mxu0 %v1498
    %1535 = vmatprep.subr.mxu0 0.0
    %1536 = vmatpush1.msra.mxu0 %v1496
    %1537 = vmatprep.subr.mxu0 0.0
    %1538 = vmatpush1.msra.mxu0 %v1494
    %1539 = vmatprep.subr.mxu0 0.0
    %1540 = vmatpush1.msra.mxu0 %v1492
    %1541 = vmatprep.subr.mxu0 0.0
    %1542 = vmatpush2.msra.mxu0 0.0
    %1543 = vmatprep.subr.mxu0 0.0
    %1544 = vmatpush2.msra.mxu0 0.0
    %1545 = vmatprep.subr.mxu0 0.0
    %1546 = vmatpush2.msra.mxu0 0.0
    %1547 = vmatprep.subr.mxu0 0.0
    %1548 = vmatpush2.msra.mxu0 0.0
    %1549 = vmatprep.subr.mxu0 0.0
    %1550 = vmatpush2.msra.mxu0 0.0
    %1551 = vmatprep.subr.mxu0 0.0
    %1552 = vmatpush2.msra.mxu0 0.0
    %1553 = vmatprep.subr.mxu0 0.0
    %1554 = vmatpush2.msra.mxu0 0.0
    %1555 = vmatprep.subr.mxu0 0.0
    %1556 = vmatpush2.msra.mxu0 0.0
    %1557 = vmatprep.subr.mxu0 0.0
    %1558 = vmatpush2.msra.mxu0 0.0
    %1559 = vmatprep.subr.mxu0 0.0
    %1560 = vmatpush2.msra.mxu0 0.0
    %1561 = vmatprep.subr.mxu0 0.0
    %1562 = vmatpush2.msra.mxu0 0.0
    %1563 = vmatprep.subr.mxu0 0.0
    %1564 = vmatpush2.msra.mxu0 0.0
    %1565 = vmatprep.subr.mxu0 0.0
    %1566 = vmatpush2.msra.mxu0 0.0
    %1567 = vmatprep.subr.mxu0 0.0
    %1568 = vmatpush2.msra.mxu0 0.0
    %1569 = vmatprep.subr.mxu0 0.0
    %1570 = vmatpush2.msra.mxu0 0.0
    %1571 = vmatprep.subr.mxu0 0.0
    %1572 = vmatpush2.msra.mxu0 0.0
    %1573 = vmatprep.mubr.f32.mxu0 0.0
    %1574 = vmatmul.mubr.f32.gmra.mxu0 %v1504
    %v1575 = vpop.f32.mrf.mxu0
    %v1576 = vadd.f32 %v1486, %v1575
    %v1577 = vpop.f32.mrf.mxu0
    %1578 = vmatprep.mubr.f32.mxu0 0.0
    %1579 = vmatmul.mubr.f32.gmra.mxu0 %v1507
    %v1580 = vpop.f32.mrf.mxu0
    %v1581 = vadd.f32 %v1486, %v1580
    %v1582 = vpop.f32.mrf.mxu0
    %1583 = vdwg.mxu0
    %v1584 = vadd.f32 %v992, %v1576
    %v1585 = vadd.f32 %v993, %v1581
    %v1586 = vld [vmem:[%s1 + $0xe] sm:$0x1]
    %v1587 = vld [vmem:[%s1 + $0xf] sm:$0x1]
    %v1588 = vsel %vm46, %v1584, 0.0
    %1589 = vadd.xlane.f32.xlu0 %v1588
    %v1590 = vpop.xlane.xlu0 %1589
    %v1591 = vsel %vm46, %v1585, 0.0
    %1592 = vadd.xlane.f32.xlu0 %v1591
    %v1593 = vpop.xlane.xlu0 %1592
    %v1594 = vmul.f32 %v1590, %v53
    %v1595 = vmul.f32 %v1593, %v53
    %v1596 = vmul.f32 %v1584, %v1584
    %v1597 = vmul.f32 %v1585, %v1585
    %v1598 = vsel %vm46, %v1596, 0.0
    %1599 = vadd.xlane.f32.xlu0 %v1598
    %v1600 = vpop.xlane.xlu0 %1599
    %v1601 = vsel %vm46, %v1597, 0.0
    %1602 = vadd.xlane.f32.xlu0 %v1601
    %v1603 = vpop.xlane.xlu0 %1602
    %v1604 = vmul.f32 %v1600, %v53
    %v1605 = vmul.f32 %v1603, %v53
    %v1606 = vmul.f32 %v1594, %v1594
    %v1607 = vmul.f32 %v1595, %v1595
    %v1608 = vsub.f32 %v1604, %v1606
    %v1609 = vsub.f32 %v1605, %v1607
    %v1610 = vsub.f32 %v1584, %v1594
    %v1611 = vsub.f32 %v1585, %v1595
    %v1612 = vadd.f32 %v1608, 1e-12
    %v1613 = vadd.f32 %v1609, 1e-12
    %v1614 = vrsqrt.pop %v1612
    %v1615 = vrsqrt.pop %v1613
    %v1616 = vmul.f32 %v1610, %v1614
    %v1617 = vmul.f32 %v1611, %v1615
    %v1618 = vlaneseq
    %v1619 = vshrl.u32 %v1618, 7
    %v1620 = vsub.s32 0, %v1619
    %v1621 = vrot.slane %v1586, %v1620
    %v1622 = vmul.f32 %v1616, %v1621
    %v1623 = vmul.f32 %v1617, %v1621
    %v1624 = vlaneseq
    %v1625 = vshrl.u32 %v1624, 7
    %v1626 = vsub.s32 0, %v1625
    %v1627 = vrot.slane %v1587, %v1626
    %v1628 = vadd.f32 %v1622, %v1627
    %v1629 = vadd.f32 %v1623, %v1627
    %v1630 = vld [vmem:[%s1 + $0x10] sm:$0x1]
    %v1631 = vlaneseq
    %v1632 = vshrl.u32 %v1631, 7
    %v1633 = vsub.s32 0, %v1632
    %v1634 = vrot.slane %v1630, %v1633
    %v1636 = vsel %vm46, %v1628, 0
    %v1639 = vsel %vm46, %v1629, 0
    %1641 = vmatprep.subr.mxu0 0.0
    %1642 = vmatpush1.msra.mxu0 0.0
    %1643 = vmatprep.subr.mxu0 0.0
    %1644 = vmatpush1.msra.mxu0 0.0
    %1645 = vmatprep.subr.mxu0 0.0
    %1646 = vmatpush1.msra.mxu0 0.0
    %1647 = vmatprep.subr.mxu0 0.0
    %1648 = vmatpush1.msra.mxu0 0.0
    %1649 = vmatprep.subr.mxu0 0.0
    %1650 = vmatpush1.msra.mxu0 0.0
    %1651 = vmatprep.subr.mxu0 0.0
    %1652 = vmatpush1.msra.mxu0 0.0
    %1653 = vmatprep.subr.mxu0 0.0
    %1654 = vmatpush1.msra.mxu0 0.0
    %1655 = vmatprep.subr.mxu0 0.0
    %1656 = vmatpush1.msra.mxu0 0.0
    %1657 = vmatprep.subr.mxu0 0.0
    %1658 = vmatpush1.msra.mxu0 0.0
    %1659 = vmatprep.subr.mxu0 0.0
    %1660 = vmatpush1.msra.mxu0 0.0
    %1661 = vmatprep.subr.mxu0 0.0
    %1662 = vmatpush1.msra.mxu0 0.0
    %1663 = vmatprep.subr.mxu0 0.0
    %1664 = vmatpush1.msra.mxu0 0.0
    %1665 = vmatprep.subr.mxu0 0.0
    %1666 = vmatpush1.msra.mxu0 %v1002
    %1667 = vmatprep.subr.mxu0 0.0
    %1668 = vmatpush1.msra.mxu0 %v1001
    %1669 = vmatprep.subr.mxu0 0.0
    %1670 = vmatpush1.msra.mxu0 %v1000
    %1671 = vmatprep.subr.mxu0 0.0
    %1672 = vmatpush1.msra.mxu0 %v999
    %1673 = vmatprep.subr.mxu0 0.0
    %1674 = vmatpush2.msra.mxu0 0.0
    %1675 = vmatprep.subr.mxu0 0.0
    %1676 = vmatpush2.msra.mxu0 0.0
    %1677 = vmatprep.subr.mxu0 0.0
    %1678 = vmatpush2.msra.mxu0 0.0
    %1679 = vmatprep.subr.mxu0 0.0
    %1680 = vmatpush2.msra.mxu0 0.0
    %1681 = vmatprep.subr.mxu0 0.0
    %1682 = vmatpush2.msra.mxu0 0.0
    %1683 = vmatprep.subr.mxu0 0.0
    %1684 = vmatpush2.msra.mxu0 0.0
    %1685 = vmatprep.subr.mxu0 0.0
    %1686 = vmatpush2.msra.mxu0 0.0
    %1687 = vmatprep.subr.mxu0 0.0
    %1688 = vmatpush2.msra.mxu0 0.0
    %1689 = vmatprep.subr.mxu0 0.0
    %1690 = vmatpush2.msra.mxu0 0.0
    %1691 = vmatprep.subr.mxu0 0.0
    %1692 = vmatpush2.msra.mxu0 0.0
    %1693 = vmatprep.subr.mxu0 0.0
    %1694 = vmatpush2.msra.mxu0 0.0
    %1695 = vmatprep.subr.mxu0 0.0
    %1696 = vmatpush2.msra.mxu0 0.0
    %1697 = vmatprep.subr.mxu0 0.0
    %1698 = vmatpush2.msra.mxu0 0.0
    %1699 = vmatprep.subr.mxu0 0.0
    %1700 = vmatpush2.msra.mxu0 0.0
    %1701 = vmatprep.subr.mxu0 0.0
    %1702 = vmatpush2.msra.mxu0 0.0
    %1703 = vmatprep.subr.mxu0 0.0
    %1704 = vmatpush2.msra.mxu0 0.0
    %1705 = vmatprep.mubr.f32.mxu0 0.0
    %1706 = vmatmul.mubr.f32.gmra.mxu0 %v1636
    %v1707 = vpop.f32.mrf.mxu0
    %v1708 = vadd.f32 %v1634, %v1707
    %v1709 = vpop.f32.mrf.mxu0
    %1710 = vmatprep.mubr.f32.mxu0 0.0
    %1711 = vmatmul.mubr.f32.gmra.mxu0 %v1639
    %v1712 = vpop.f32.mrf.mxu0
    %v1713 = vadd.f32 %v1634, %v1712
    %v1714 = vpop.f32.mrf.mxu0
    %1715 = vdwg.mxu0
    %v1716 = vmul.f32 %v1708, 0.5
    %v1717 = vmul.f32 %v1713, 0.5
    %v1718 = vmul.f32 %v1708, 0.044715
    %v1719 = vmul.f32 %v1713, 0.044715
    %v1720 = vmul.f32 %v1718, %v1708
    %v1721 = vmul.f32 %v1719, %v1713
    %v1722 = vmul.f32 %v1720, %v1708
    %v1723 = vmul.f32 %v1721, %v1713
    %v1724 = vadd.f32 %v1708, %v1722
    %v1725 = vadd.f32 %v1713, %v1723
    %v1726 = vmul.f32 %v1724, 0.7978846
    %v1727 = vmul.f32 %v1725, 0.7978846
    %v1728 = vtanh.pop %v1726
    %v1729 = vtanh.pop %v1727
    %v1730 = vadd.f32 %v1728, 1.0
    %v1731 = vadd.f32 %v1729, 1.0
    %v1732 = vmul.f32 %v1716, %v1730
    %v1733 = vmul.f32 %v1717, %v1731
    %v1734 = vld [vmem:[%s1 + $0x11] sm:$0x1]
    %v1735 = vlaneseq
    %v1736 = vshrl.u32 %v1735, 7
    %v1737 = vsub.s32 0, %v1736
    %v1738 = vrot.slane %v1734, %v1737
    %v1740 = vsel %vm866, %v1732, 0
    %v1743 = vsel %vm866, %v1733, 0
    %1745 = vmatprep.subr.mxu0 0.0
    %1746 = vmatpush1.msra.mxu0 0.0
    %1747 = vmatprep.subr.mxu0 0.0
    %1748 = vmatpush1.msra.mxu0 0.0
    %1749 = vmatprep.subr.mxu0 0.0
    %1750 = vmatpush1.msra.mxu0 0.0
    %1751 = vmatprep.subr.mxu0 0.0
    %1752 = vmatpush1.msra.mxu0 0.0
    %1753 = vmatprep.subr.mxu0 0.0
    %1754 = vmatpush1.msra.mxu0 0.0
    %1755 = vmatprep.subr.mxu0 0.0
    %1756 = vmatpush1.msra.mxu0 0.0
    %1757 = vmatprep.subr.mxu0 0.0
    %1758 = vmatpush1.msra.mxu0 0.0
    %1759 = vmatprep.subr.mxu0 0.0
    %1760 = vmatpush1.msra.mxu0 0.0
    %1761 = vmatprep.subr.mxu0 0.0
    %1762 = vmatpush1.msra.mxu0 %v1011
    %1763 = vmatprep.subr.mxu0 0.0
    %1764 = vmatpush1.msra.mxu0 %v1010
    %1765 = vmatprep.subr.mxu0 0.0
    %1766 = vmatpush1.msra.mxu0 %v1009
    %1767 = vmatprep.subr.mxu0 0.0
    %1768 = vmatpush1.msra.mxu0 %v1008
    %1769 = vmatprep.subr.mxu0 0.0
    %1770 = vmatpush1.msra.mxu0 %v1007
    %1771 = vmatprep.subr.mxu0 0.0
    %1772 = vmatpush1.msra.mxu0 %v1006
    %1773 = vmatprep.subr.mxu0 0.0
    %1774 = vmatpush1.msra.mxu0 %v1005
    %1775 = vmatprep.subr.mxu0 0.0
    %1776 = vmatpush1.msra.mxu0 %v1004
    %1777 = vmatprep.subr.mxu0 0.0
    %1778 = vmatpush2.msra.mxu0 0.0
    %1779 = vmatprep.subr.mxu0 0.0
    %1780 = vmatpush2.msra.mxu0 0.0
    %1781 = vmatprep.subr.mxu0 0.0
    %1782 = vmatpush2.msra.mxu0 0.0
    %1783 = vmatprep.subr.mxu0 0.0
    %1784 = vmatpush2.msra.mxu0 0.0
    %1785 = vmatprep.subr.mxu0 0.0
    %1786 = vmatpush2.msra.mxu0 0.0
    %1787 = vmatprep.subr.mxu0 0.0
    %1788 = vmatpush2.msra.mxu0 0.0
    %1789 = vmatprep.subr.mxu0 0.0
    %1790 = vmatpush2.msra.mxu0 0.0
    %1791 = vmatprep.subr.mxu0 0.0
    %1792 = vmatpush2.msra.mxu0 0.0
    %1793 = vmatprep.subr.mxu0 0.0
    %1794 = vmatpush2.msra.mxu0 0.0
    %1795 = vmatprep.subr.mxu0 0.0
    %1796 = vmatpush2.msra.mxu0 0.0
    %1797 = vmatprep.subr.mxu0 0.0
    %1798 = vmatpush2.msra.mxu0 0.0
    %1799 = vmatprep.subr.mxu0 0.0
    %1800 = vmatpush2.msra.mxu0 0.0
    %1801 = vmatprep.subr.mxu0 0.0
    %1802 = vmatpush2.msra.mxu0 0.0
    %1803 = vmatprep.subr.mxu0 0.0
    %1804 = vmatpush2.msra.mxu0 0.0
    %1805 = vmatprep.subr.mxu0 0.0
    %1806 = vmatpush2.msra.mxu0 0.0
    %1807 = vmatprep.subr.mxu0 0.0
    %1808 = vmatpush2.msra.mxu0 0.0
    %1809 = vmatprep.mubr.f32.mxu0 0.0
    %1810 = vmatmul.mubr.f32.gmra.mxu0 %v1740
    %v1811 = vpop.f32.mrf.mxu0
    %v1812 = vadd.f32 %v1738, %v1811
    %v1813 = vpop.f32.mrf.mxu0
    %1814 = vmatprep.mubr.f32.mxu0 0.0
    %1815 = vmatmul.mubr.f32.gmra.mxu0 %v1743
    %v1816 = vpop.f32.mrf.mxu0
    %v1817 = vadd.f32 %v1738, %v1816
    %v1818 = vpop.f32.mrf.mxu0
    %1819 = vdwg.mxu0
    %v1820 = vadd.f32 %v1628, %v1812
    %v1821 = vadd.f32 %v1629, %v1817
    %v1822 = vld [vmem:[%s1 + $0x12] sm:$0x1]
    %v1823 = vld [vmem:[%s1 + $0x13] sm:$0x1]
    %v1824 = vsel %vm46, %v1820, 0.0
    %1825 = vadd.xlane.f32.xlu0 %v1824
    %v1826 = vpop.xlane.xlu0 %1825
    %v1827 = vsel %vm46, %v1821, 0.0
    %1828 = vadd.xlane.f32.xlu0 %v1827
    %v1829 = vpop.xlane.xlu0 %1828
    %v1830 = vmul.f32 %v1826, %v53
    %v1831 = vmul.f32 %v1829, %v53
    %v1832 = vmul.f32 %v1820, %v1820
    %v1833 = vmul.f32 %v1821, %v1821
    %v1834 = vsel %vm46, %v1832, 0.0
    %1835 = vadd.xlane.f32.xlu0 %v1834
    %v1836 = vpop.xlane.xlu0 %1835
    %v1837 = vsel %vm46, %v1833, 0.0
    %1838 = vadd.xlane.f32.xlu0 %v1837
    %v1839 = vpop.xlane.xlu0 %1838
    %v1840 = vmul.f32 %v1836, %v53
    %v1841 = vmul.f32 %v1839, %v53
    %v1842 = vmul.f32 %v1830, %v1830
    %v1843 = vmul.f32 %v1831, %v1831
    %v1844 = vsub.f32 %v1840, %v1842
    %v1845 = vsub.f32 %v1841, %v1843
    %v1846 = vsub.f32 %v1820, %v1830
    %v1847 = vsub.f32 %v1821, %v1831
    %v1848 = vadd.f32 %v1844, 1e-12
    %v1849 = vadd.f32 %v1845, 1e-12
    %v1850 = vrsqrt.pop %v1848
    %v1851 = vrsqrt.pop %v1849
    %v1852 = vmul.f32 %v1846, %v1850
    %v1853 = vmul.f32 %v1847, %v1851
    %v1854 = vlaneseq
    %v1855 = vshrl.u32 %v1854, 7
    %v1856 = vsub.s32 0, %v1855
    %v1857 = vrot.slane %v1822, %v1856
    %v1858 = vmul.f32 %v1852, %v1857
    %v1859 = vmul.f32 %v1853, %v1857
    %v1860 = vlaneseq
    %v1861 = vshrl.u32 %v1860, 7
    %v1862 = vsub.s32 0, %v1861
    %v1863 = vrot.slane %v1823, %v1862
    %v1864 = vadd.f32 %v1858, %v1863
    %v1865 = vadd.f32 %v1859, %v1863
    %v1867 = vrot.slane %v1865, 7
    %vm1869 = vcmask 1040384
    %v1870 = vsel %vm1869, %v1864, %v1867
    %s1871 = scalar_lea.vmem %s3, 128
    %v1872 = vld [vmem:[%s1871] sm:$0xff]
    %v1873 = vld [vmem:[%s1871 + $0x10] sm:$0xff]
    %v1874 = vld [vmem:[%s1871 + $0x20] sm:$0xff]
    %v1875 = vld [vmem:[%s1871 + $0x30] sm:$0xff]
    %v1876 = vld [vmem:[%s1 + $0x2] sm:$0x1]
    %v1877 = vlaneseq
    %v1878 = vshrl.u32 %v1877, 7
    %v1879 = vsub.s32 0, %v1878
    %v1880 = vrot.slane %v1876, %v1879
    %v1882 = vsel %vm46, %v1870, 0
    %1884 = vmatprep.subr.mxu0 0.0
    %1885 = vmatpush1.msra.mxu0 0.0
    %1886 = vmatprep.subr.mxu0 0.0
    %1887 = vmatpush1.msra.mxu0 0.0
    %1888 = vmatprep.subr.mxu0 0.0
    %1889 = vmatpush1.msra.mxu0 0.0
    %1890 = vmatprep.subr.mxu0 0.0
    %1891 = vmatpush1.msra.mxu0 0.0
    %1892 = vmatprep.subr.mxu0 0.0
    %1893 = vmatpush1.msra.mxu0 0.0
    %1894 = vmatprep.subr.mxu0 0.0
    %1895 = vmatpush1.msra.mxu0 0.0
    %1896 = vmatprep.subr.mxu0 0.0
    %1897 = vmatpush1.msra.mxu0 0.0
    %1898 = vmatprep.subr.mxu0 0.0
    %1899 = vmatpush1.msra.mxu0 0.0
    %1900 = vmatprep.subr.mxu0 0.0
    %1901 = vmatpush1.msra.mxu0 0.0
    %1902 = vmatprep.subr.mxu0 0.0
    %1903 = vmatpush1.msra.mxu0 0.0
    %1904 = vmatprep.subr.mxu0 0.0
    %1905 = vmatpush1.msra.mxu0 0.0
    %1906 = vmatprep.subr.mxu0 0.0
    %1907 = vmatpush1.msra.mxu0 0.0
    %1908 = vmatprep.subr.mxu0 0.0
    %1909 = vmatpush1.msra.mxu0 %v1875
    %1910 = vmatprep.subr.mxu0 0.0
    %1911 = vmatpush1.msra.mxu0 %v1874
    %1912 = vmatprep.subr.mxu0 0.0
    %1913 = vmatpush1.msra.mxu0 %v1873
    %1914 = vmatprep.subr.mxu0 0.0
    %1915 = vmatpush1.msra.mxu0 %v1872
    %1916 = vmatprep.subr.mxu0 0.0
    %1917 = vmatpush2.msra.mxu0 0.0
    %1918 = vmatprep.subr.mxu0 0.0
    %1919 = vmatpush2.msra.mxu0 0.0
    %1920 = vmatprep.subr.mxu0 0.0
    %1921 = vmatpush2.msra.mxu0 0.0
    %1922 = vmatprep.subr.mxu0 0.0
    %1923 = vmatpush2.msra.mxu0 0.0
    %1924 = vmatprep.subr.mxu0 0.0
    %1925 = vmatpush2.msra.mxu0 0.0
    %1926 = vmatprep.subr.mxu0 0.0
    %1927 = vmatpush2.msra.mxu0 0.0
    %1928 = vmatprep.subr.mxu0 0.0
    %1929 = vmatpush2.msra.mxu0 0.0
    %1930 = vmatprep.subr.mxu0 0.0
    %1931 = vmatpush2.msra.mxu0 0.0
    %1932 = vmatprep.subr.mxu0 0.0
    %1933 = vmatpush2.msra.mxu0 0.0
    %1934 = vmatprep.subr.mxu0 0.0
    %1935 = vmatpush2.msra.mxu0 0.0
    %1936 = vmatprep.subr.mxu0 0.0
    %1937 = vmatpush2.msra.mxu0 0.0
    %1938 = vmatprep.subr.mxu0 0.0
    %1939 = vmatpush2.msra.mxu0 0.0
    %1940 = vmatprep.subr.mxu0 0.0
    %1941 = vmatpush2.msra.mxu0 0.0
    %1942 = vmatprep.subr.mxu0 0.0
    %1943 = vmatpush2.msra.mxu0 0.0
    %1944 = vmatprep.subr.mxu0 0.0
    %1945 = vmatpush2.msra.mxu0 0.0
    %1946 = vmatprep.subr.mxu0 0.0
    %1947 = vmatpush2.msra.mxu0 0.0
    %1948 = vmatprep.mubr.f32.mxu0 0.0
    %1949 = vmatmul.mubr.f32.gmra.mxu0 %v1882
    %v1950 = vpop.f32.mrf.mxu0
    %v1951 = vadd.f32 %v1880, %v1950
    %v1952 = vpop.f32.mrf.mxu0
    %1953 = vdwg.mxu0
    %v1954 = vtanh.pop %v1951
    %v1955 = vld [vmem:[%s1 + $0x3] sm:$0x1]
    %v1956 = vlaneseq
    %v1957 = vshrl.u32 %v1956, 7
    %v1958 = vsub.s32 0, %v1957
    %v1959 = vrot.slane %v1955, %v1958
    %1964 = vrot.lane.b32.xlu0 %v1872, 96
    %v1965 = vpop.permute.xlu0 %1964
    %1966 = vrot.lane.b32.xlu0 %v1873, 96
    %v1967 = vpop.permute.xlu0 %1966
    %1968 = vrot.lane.b32.xlu0 %v1874, 96
    %v1969 = vpop.permute.xlu0 %1968
    %1970 = vrot.lane.b32.xlu0 %v1875, 96
    %v1971 = vpop.permute.xlu0 %1970
    %v1977 = vsel %vm46, %v1954, 0
    %1979 = vmatprep.subr.mxu0 0.0
    %1980 = vmatpush1.msra.mxu0 0.0
    %1981 = vmatprep.subr.mxu0 0.0
    %1982 = vmatpush1.msra.mxu0 0.0
    %1983 = vmatprep.subr.mxu0 0.0
    %1984 = vmatpush1.msra.mxu0 0.0
    %1985 = vmatprep.subr.mxu0 0.0
    %1986 = vmatpush1.msra.mxu0 0.0
    %1987 = vmatprep.subr.mxu0 0.0
    %1988 = vmatpush1.msra.mxu0 0.0
    %1989 = vmatprep.subr.mxu0 0.0
    %1990 = vmatpush1.msra.mxu0 0.0
    %1991 = vmatprep.subr.mxu0 0.0
    %1992 = vmatpush1.msra.mxu0 0.0
    %1993 = vmatprep.subr.mxu0 0.0
    %1994 = vmatpush1.msra.mxu0 0.0
    %1995 = vmatprep.subr.mxu0 0.0
    %1996 = vmatpush1.msra.mxu0 0.0
    %1997 = vmatprep.subr.mxu0 0.0
    %1998 = vmatpush1.msra.mxu0 0.0
    %1999 = vmatprep.subr.mxu0 0.0
    %2000 = vmatpush1.msra.mxu0 0.0
    %2001 = vmatprep.subr.mxu0 0.0
    %2002 = vmatpush1.msra.mxu0 0.0
    %2003 = vmatprep.subr.mxu0 0.0
    %2004 = vmatpush1.msra.mxu0 %v1971
    %2005 = vmatprep.subr.mxu0 0.0
    %2006 = vmatpush1.msra.mxu0 %v1969
    %2007 = vmatprep.subr.mxu0 0.0
    %2008 = vmatpush1.msra.mxu0 %v1967
    %2009 = vmatprep.subr.mxu0 0.0
    %2010 = vmatpush1.msra.mxu0 %v1965
    %2011 = vmatprep.subr.mxu0 0.0
    %2012 = vmatpush2.msra.mxu0 0.0
    %2013 = vmatprep.subr.mxu0 0.0
    %2014 = vmatpush2.msra.mxu0 0.0
    %2015 = vmatprep.subr.mxu0 0.0
    %2016 = vmatpush2.msra.mxu0 0.0
    %2017 = vmatprep.subr.mxu0 0.0
    %2018 = vmatpush2.msra.mxu0 0.0
    %2019 = vmatprep.subr.mxu0 0.0
    %2020 = vmatpush2.msra.mxu0 0.0
    %2021 = vmatprep.subr.mxu0 0.0
    %2022 = vmatpush2.msra.mxu0 0.0
    %2023 = vmatprep.subr.mxu0 0.0
    %2024 = vmatpush2.msra.mxu0 0.0
    %2025 = vmatprep.subr.mxu0 0.0
    %2026 = vmatpush2.msra.mxu0 0.0
    %2027 = vmatprep.subr.mxu0 0.0
    %2028 = vmatpush2.msra.mxu0 0.0
    %2029 = vmatprep.subr.mxu0 0.0
    %2030 = vmatpush2.msra.mxu0 0.0
    %2031 = vmatprep.subr.mxu0 0.0
    %2032 = vmatpush2.msra.mxu0 0.0
    %2033 = vmatprep.subr.mxu0 0.0
    %2034 = vmatpush2.msra.mxu0 0.0
    %2035 = vmatprep.subr.mxu0 0.0
    %2036 = vmatpush2.msra.mxu0 0.0
    %2037 = vmatprep.subr.mxu0 0.0
    %2038 = vmatpush2.msra.mxu0 0.0
    %2039 = vmatprep.subr.mxu0 0.0
    %2040 = vmatpush2.msra.mxu0 0.0
    %2041 = vmatprep.subr.mxu0 0.0
    %2042 = vmatpush2.msra.mxu0 0.0
    %2043 = vmatprep.mubr.f32.mxu0 0.0
    %2044 = vmatmul.mubr.f32.gmra.mxu0 %v1977
    %v2045 = vpop.f32.mrf.mxu0
    %v2046 = vadd.f32 %v1959, %v2045
    %v2047 = vpop.f32.mrf.mxu0
    %2048 = vdwg.mxu0
    %vm2049 = vcmask 33792
    %2050 = vst.msk [vmem:[#allocation2] sm:$0x3] %vm2049, %v2046
    // Predicated region
    $region22: #{tpu_custom_call.1} parent=1 // pred_check
      _
    $region23: #{tpu_custom_call.1} parent=1 // pred_check_branch
      %2052 = sbr.rel (0) target = $region25
    $region24: #{tpu_custom_call.1} parent=1 // pred_region
      %s2054 = ssub.s32 32, 32
      %2055 = vsyncadd [#allocation3], %s2054
      %s2057 = sshll.u32 [#allocation2], 4
      %s2058 = int_to_ptr.vmem [resolvable:$true] %s2057
      %2060 = dma.vmem_to_hbm [thread:$0]  %s2058, 32, %s5, [#allocation3]
    $region25: #{tpu_custom_call.1} parent=1 // pred_fallthru
      _
    // Predicated region
    $region26: #{tpu_custom_call.1} parent=1 // pred_check
      _
    $region27: #{tpu_custom_call.1} parent=1 // pred_check_branch
      %2062 = sbr.rel (0) target = $region29
    $region28: #{tpu_custom_call.1} parent=1 // pred_region
      %2063 = dma.done [#allocation3], 32
    $region29: #{tpu_custom_call.1} parent=1 // pred_fallthru
      _
    %2064 = vsyncpa [#allocation3], 1

</llo_original>
